<compile_context>
chip_gen: v6e
topology: v6e:2x2x1
jax: 0.10.0
libtpu: 0.0.40
codegen_flags: <defaults>
</compile_context>

<pallas_src>
import functools
import math

import jax
import jax.numpy as jnp
from jax.experimental import pallas as pl
from jax.experimental.pallas import tpu as pltpu


def _mha_addnorm_kernel(q_ref, k_ref, v_ref,
                        wq_ref, wk_ref, wv_ref,
                        bq_ref, bk_ref, bv_ref,
                        wo_ref, bo_ref,
                        gamma_ref, beta_ref,
                        out_ref, acc_ref,
                        *, heads_per_block, head_dim, exact_softmax):
    f32 = jnp.float32
    hb = pl.program_id(2)
    last_hb = pl.num_programs(2) - 1
    G, D = heads_per_block, head_dim

    @pl.when(hb == 0)
    def _():
        acc_ref[...] = jnp.zeros_like(acc_ref)

    # Matmul operand dtype (bf16 by default, f32 for the debug-exact path);
    # accumulation is always f32 via preferred_element_type.
    cd = wq_ref.dtype

    q_res = q_ref[0]                       # (Lq, E) f32 — kept for the residual
    qc = q_res.astype(cd)
    kc = k_ref[0]                          # (Lk, E), already compute dtype (pre-cast in wrapper)
    vc = v_ref[0]

    # Contract last dims of both operands: x @ W^T with no in-kernel transpose.
    tt = (((1,), (1,)), ((), ()))

    # Project a block of G heads with one wide matmul each (N = G*D).
    # 1/sqrt(D) is already folded into wq/bq.  Biases are resident; index by hb.
    qh = jax.lax.dot_general(qc, wq_ref[0], tt, preferred_element_type=f32) + bq_ref[hb]
    kh = jax.lax.dot_general(kc, wk_ref[0], tt, preferred_element_type=f32) + bk_ref[hb]
    vh = jax.lax.dot_general(vc, wv_ref[0], tt, preferred_element_type=f32) + bv_ref[hb]

    Lq = qh.shape[0]
    Lk = kh.shape[0]
    qh3 = qh.reshape(Lq, G, D).astype(cd)
    kh3 = kh.reshape(Lk, G, D).astype(cd)
    vh3 = vh.reshape(Lk, G, D).astype(cd)

    # Batched per-head attention inside the head block (scale pre-folded).
    s = jnp.einsum("qgd,kgd->gqk", qh3, kh3,
                   preferred_element_type=f32)                       # (G, Lq, Lk)
    s = s - jnp.max(s, axis=-1, keepdims=True)
    p = jnp.exp(s)
    denom = jnp.sum(p, axis=-1, keepdims=True)
    if exact_softmax:
        p = p / denom
    else:
        p = p * pl.reciprocal(denom, approx=True)

    o = jnp.einsum("gqk,kgd->qgd", p.astype(cd), vh3,
                   preferred_element_type=f32)                       # (Lq, G, D)
    o = o.reshape(Lq, G * D)

    # Per-head-block partial of the output projection, accumulated over blocks
    # (contraction width G*D instead of D).
    acc_ref[...] += jnp.dot(o.astype(cd), wo_ref[0], preferred_element_type=f32)

    @pl.when(hb == last_hb)
    def _():
        # dropout = identity (eval mode); add output-proj bias once, residual,
        # then LayerNorm (eps matches PyTorch default 1e-5).
        x = q_res + acc_ref[...] + bo_ref[...]
        mean = jnp.mean(x, axis=-1, keepdims=True)
        var = jnp.mean((x - mean) ** 2, axis=-1, keepdims=True)
        y = (x - mean) * jax.lax.rsqrt(var + 1e-5)
        out_ref[0] = y * gamma_ref[...] + beta_ref[...]


def _pick_heads_per_block(n_heads, head_dim):
    """Largest divisor G of n_heads with G*head_dim <= 512.

    Keeps per-block score/projection tiles bounded while making the projection
    N-dim / output-projection K-dim as wide as possible for the MXU.
    """
    best = 1
    for g in range(1, n_heads + 1):
        if n_heads % g == 0 and g * head_dim <= 512:
            best = g
    return best


def pack_params(params, n_heads, compute_dtype=jnp.bfloat16, heads_per_block=None):
    """One-time parameter preprocessing (reshape / head-block / scale-fold / cast).

    Default compute_dtype is bf16 (MXU-native on v5e/v6e/v7x); pass
    compute_dtype=jnp.float32 for the debug-exact path.
    """
    E = params["wq"].shape[0]
    D = E // n_heads
    assert D * n_heads == E
    if heads_per_block is None:
        heads_per_block = _pick_heads_per_block(n_heads, D)
    assert n_heads % heads_per_block == 0
    G = heads_per_block
    HB = n_heads // G
    GD = G * D
    scale = 1.0 / math.sqrt(D)
    cd = compute_dtype
    f32 = jnp.float32
    packed = {
        # (HB, G*D, E): per-head-block projection weights; contract on last dim.
        "wq": (params["wq"] * scale).reshape(HB, GD, E).astype(cd),
        "wk": params["wk"].reshape(HB, GD, E).astype(cd),
        "wv": params["wv"].reshape(HB, GD, E).astype(cd),
        # Biases stay resident in VMEM (full arrays, constant index_map).
        "bq": (params["bq"] * scale).reshape(HB, 1, GD).astype(f32),
        "bk": params["bk"].reshape(HB, 1, GD).astype(f32),
        "bv": params["bv"].reshape(HB, 1, GD).astype(f32),
        # (HB, G*D, E): block slice maps (Lq, G*D) -> (Lq, E) partial.
        "wo": params["wo"].T.reshape(HB, GD, E).astype(cd),
        "bo": params["bo"].reshape(1, E).astype(f32),
        "ln_gamma": params["ln_gamma"].reshape(1, E).astype(f32),
        "ln_beta": params["ln_beta"].reshape(1, E).astype(f32),
        # Static metadata (plain Python ints, not passed to pallas_call).
        "head_dim": D,
        "heads_per_block": G,
    }
    return packed


def mha_addnorm(Q, K, V, packed, *, lq_tile=None, exact_softmax=None,
                vmem_limit_bytes=48 * 1024 * 1024):
    """Q: (B, Lq, E), K/V: (B, Lk, E); packed = pack_params(...). Returns (B, Lq, E) f32."""
    B, Lt, E = Q.shape
    Bk, Ls, Ek = K.shape
    assert (Bk, Ek) == (B, E) and V.shape == K.shape
    HB, GD, _ = packed["wq"].shape
    G = packed["heads_per_block"]
    D = packed["head_dim"]
    cd = packed["wq"].dtype
    if exact_softmax is None:
        exact_softmax = (cd == jnp.float32)   # exact divide on the debug-exact path

    # Query-dim tiling (bounds VMEM / score-matrix size; extra parallel axis).
    if lq_tile is None:
        lq_tile = Lt if Lt <= 256 else (256 if Lt % 256 == 0 else Lt)
    assert Lt % lq_tile == 0 and (lq_tile == Lt or lq_tile % 8 == 0)
    num_lq = Lt // lq_tile

    Qf = Q.astype(jnp.float32)   # f32 copy for the residual + LayerNorm
    Kc = K.astype(cd)            # pre-cast once: no per-step casts, half the DMA in bf16
    Vc = V.astype(cd)

    q_spec = pl.BlockSpec((1, lq_tile, E), lambda b, lq, hb: (b, lq, 0))
    kv_spec = pl.BlockSpec((1, Ls, E), lambda b, lq, hb: (b, 0, 0))
    w_spec = pl.BlockSpec((1, GD, E), lambda b, lq, hb: (hb, 0, 0))
    bias_spec = pl.BlockSpec((HB, 1, GD), lambda b, lq, hb: (0, 0, 0))   # resident
    vec_spec = pl.BlockSpec((1, E), lambda b, lq, hb: (0, 0))
    out_spec = pl.BlockSpec((1, lq_tile, E), lambda b, lq, hb: (b, lq, 0))

    kernel = functools.partial(_mha_addnorm_kernel, heads_per_block=G,
                               head_dim=D, exact_softmax=exact_softmax)

    return pl.pallas_call(
        kernel,
        out_shape=jax.ShapeDtypeStruct((B, Lt, E), jnp.float32),
        grid_spec=pltpu.PrefetchScalarGridSpec(
            num_scalar_prefetch=0,
            grid=(B, num_lq, HB),            # head-block (reduction) axis last
            in_specs=[q_spec, kv_spec, kv_spec,
                      w_spec, w_spec, w_spec,
                      bias_spec, bias_spec, bias_spec,
                      w_spec, vec_spec,
                      vec_spec, vec_spec],
            out_specs=out_spec,
            scratch_shapes=[pltpu.VMEM((lq_tile, E), jnp.float32)],
        ),
        compiler_params=pltpu.CompilerParams(
            dimension_semantics=("parallel", "parallel", "arbitrary"),
            vmem_limit_bytes=vmem_limit_bytes,   # < v7x's 64 MiB physical
        ),
    )(Qf, Kc, Vc,
      packed["wq"], packed["wk"], packed["wv"],
      packed["bq"], packed["bk"], packed["bv"],
      packed["wo"], packed["bo"],
      packed["ln_gamma"], packed["ln_beta"])


def _reference(Q, K, V, params, n_heads):
    """Pure-JAX reference (mirrors torch.nn.MultiheadAttention + Add&Norm, eval)."""
    B, L, E = Q.shape
    D = E // n_heads

    def proj(x, w, b):
        return jnp.einsum("ble,fe->blf", x, w) + b

    q = proj(Q, params["wq"], params["bq"]).reshape(B, L, n_heads, D)
    k = proj(K, params["wk"], params["bk"]).reshape(B, K.shape[1], n_heads, D)
    v = proj(V, params["wv"], params["bv"]).reshape(B, V.shape[1], n_heads, D)
    s = jnp.einsum("bqhd,bkhd->bhqk", q, k) / math.sqrt(D)
    p = jax.nn.softmax(s, axis=-1)
    o = jnp.einsum("bhqk,bkhd->bqhd", p, v).reshape(B, L, E)
    o = jnp.einsum("ble,fe->blf", o, params["wo"]) + params["bo"]
    x = Q + o
    mean = jnp.mean(x, -1, keepdims=True)
    var = jnp.mean((x - mean) ** 2, -1, keepdims=True)
    y = (x - mean) / jnp.sqrt(var + 1e-5)
    return y * params["ln_gamma"] + params["ln_beta"]


if __name__ == "__main__":
    B, L, E, n_heads = 2, 8, 32, 4

    key = jax.random.PRNGKey(0)
    keys = jax.random.split(key, 11)
    s = 0.1
    params = {
        "wq": s * jax.random.normal(keys[0], (E, E), jnp.float32),
        "wk": s * jax.random.normal(keys[1], (E, E), jnp.float32),
        "wv": s * jax.random.normal(keys[2], (E, E), jnp.float32),
        "bq": s * jax.random.normal(keys[3], (E,), jnp.float32),
        "bk": s * jax.random.normal(keys[4], (E,), jnp.float32),
        "bv": s * jax.random.normal(keys[5], (E,), jnp.float32),
        "wo": s * jax.random.normal(keys[6], (E, E), jnp.float32),
        "bo": s * jax.random.normal(keys[7], (E,), jnp.float32),
        "ln_gamma": jnp.ones((E,), jnp.float32),
        "ln_beta": jnp.zeros((E,), jnp.float32),
    }

    Q = jax.random.normal(keys[8], (B, L, E), jnp.float32)
    K = jax.random.normal(keys[9], (B, L, E), jnp.float32)
    V = jax.random.normal(keys[10], (B, L, E), jnp.float32)

    ref = _reference(Q, K, V, params, n_heads)

    # Default path: bf16 MXU operands + f32 accumulation (perf-optimal).
    packed_bf16 = pack_params(params, n_heads)            # one-time prep
    out_bf16 = jax.block_until_ready(mha_addnorm(Q, K, V, packed_bf16))
    assert out_bf16.shape == (B, L, E)
    assert float(jnp.max(jnp.abs(out_bf16 - ref))) < 0.1, "bf16 path diverged"

    # Debug-exact path: f32 operands, exact softmax divide.
    packed_f32 = pack_params(params, n_heads, compute_dtype=jnp.float32)
    out_f32 = jax.block_until_ready(mha_addnorm(Q, K, V, packed_f32))
    assert jnp.allclose(out_f32, ref, atol=2e-3, rtol=2e-3), "mismatch vs reference (f32)"

    print("KERNEL_OK")
</pallas_src>

<mosaic_0001>
module attributes {stable_mosaic.version = 11 : i64} {
  func.func @_mha_addnorm_kernel(%arg0: i32, %arg1: i32, %arg2: i32, %arg3: memref<1x8x32xf32, #tpu.memory_space<vmem>>, %arg4: memref<1x8x32xbf16, #tpu.memory_space<vmem>>, %arg5: memref<1x8x32xbf16, #tpu.memory_space<vmem>>, %arg6: memref<1x32x32xbf16, #tpu.memory_space<vmem>>, %arg7: memref<1x32x32xbf16, #tpu.memory_space<vmem>>, %arg8: memref<1x32x32xbf16, #tpu.memory_space<vmem>>, %arg9: memref<1x1x32xf32, #tpu.memory_space<vmem>>, %arg10: memref<1x1x32xf32, #tpu.memory_space<vmem>>, %arg11: memref<1x1x32xf32, #tpu.memory_space<vmem>>, %arg12: memref<1x32x32xbf16, #tpu.memory_space<vmem>>, %arg13: memref<1x32xf32, #tpu.memory_space<vmem>>, %arg14: memref<1x32xf32, #tpu.memory_space<vmem>>, %arg15: memref<1x32xf32, #tpu.memory_space<vmem>>, %arg16: memref<1x8x32xf32, #tpu.memory_space<vmem>>, %arg17: memref<8x32xf32, #tpu.memory_space<vmem>>) attributes {dimension_semantics = [#tpu.dimension_semantics<parallel>, #tpu.dimension_semantics<parallel>, #tpu.dimension_semantics<arbitrary>], iteration_bounds = array<i64: 2, 1, 1>, scalar_prefetch = 0 : i64, scratch_operands = 1 : i64, tpu.core_type = #tpu.core_type<tc>, window_params = [{transform_indices = @transform_0, window_bounds = array<i64: 1, 8, 32>}, {transform_indices = @transform_1, window_bounds = array<i64: 1, 8, 32>}, {transform_indices = @transform_2, window_bounds = array<i64: 1, 8, 32>}, {transform_indices = @transform_3, window_bounds = array<i64: 1, 32, 32>}, {transform_indices = @transform_4, window_bounds = array<i64: 1, 32, 32>}, {transform_indices = @transform_5, window_bounds = array<i64: 1, 32, 32>}, {pipeline_mode = #tpu.pipeline_mode<synchronous>, transform_indices = @transform_6, window_bounds = array<i64: 1, 1, 32>}, {pipeline_mode = #tpu.pipeline_mode<synchronous>, transform_indices = @transform_7, window_bounds = array<i64: 1, 1, 32>}, {pipeline_mode = #tpu.pipeline_mode<synchronous>, transform_indices = @transform_8, window_bounds = array<i64: 1, 1, 32>}, {transform_indices = @transform_9, window_bounds = array<i64: 1, 32, 32>}, {pipeline_mode = #tpu.pipeline_mode<synchronous>, transform_indices = @transform_10, window_bounds = array<i64: 1, 32>}, {pipeline_mode = #tpu.pipeline_mode<synchronous>, transform_indices = @transform_11, window_bounds = array<i64: 1, 32>}, {pipeline_mode = #tpu.pipeline_mode<synchronous>, transform_indices = @transform_12, window_bounds = array<i64: 1, 32>}, {transform_indices = @transform_13, window_bounds = array<i64: 1, 8, 32>}]} {
    %c0_i32 = arith.constant 0 : i32
    %0 = arith.cmpi eq, %arg2, %c0_i32 : i32
    %1 = arith.extui %0 : i1 to i32
    %c0_i32_0 = arith.constant 0 : i32
    %2 = arith.cmpi ne, %1, %c0_i32_0 : i32
    scf.if %2 {
      %cst_40 = arith.constant 0.000000e+00 : f32
      %65 = vector.broadcast %cst_40 : f32 to vector<8x32xf32>
      %c0_41 = arith.constant 0 : index
      %c0_42 = arith.constant 0 : index
      %66 = vector.load %arg17[%c0_41, %c0_42] : memref<8x32xf32, #tpu.memory_space<vmem>>, vector<8x32xf32>
      tpu.vector_store %arg17[%c0_41, %c0_42], %65 {strides = array<i32>} : memref<8x32xf32, #tpu.memory_space<vmem>>, vector<8x32xf32>,
    } else {
    }
    %c0 = arith.constant 0 : index
    %c0_1 = arith.constant 0 : index
    %c0_2 = arith.constant 0 : index
    %3 = vector.load %arg3[%c0, %c0_1, %c0_2] : memref<1x8x32xf32, #tpu.memory_space<vmem>>, vector<1x8x32xf32>
    %4 = vector.shape_cast %3 : vector<1x8x32xf32> to vector<8x32xf32>
    %5 = arith.truncf %4 : vector<8x32xf32> to vector<8x32xbf16>
    %c0_3 = arith.constant 0 : index
    %c0_4 = arith.constant 0 : index
    %c0_5 = arith.constant 0 : index
    %6 = vector.load %arg4[%c0_3, %c0_4, %c0_5] : memref<1x8x32xbf16, #tpu.memory_space<vmem>>, vector<1x8x32xbf16>
    %7 = vector.shape_cast %6 : vector<1x8x32xbf16> to vector<8x32xbf16>
    %c0_6 = arith.constant 0 : index
    %c0_7 = arith.constant 0 : index
    %c0_8 = arith.constant 0 : index
    %8 = vector.load %arg5[%c0_6, %c0_7, %c0_8] : memref<1x8x32xbf16, #tpu.memory_space<vmem>>, vector<1x8x32xbf16>
    %9 = vector.shape_cast %8 : vector<1x8x32xbf16> to vector<8x32xbf16>
    %c0_9 = arith.constant 0 : index
    %c0_10 = arith.constant 0 : index
    %c0_11 = arith.constant 0 : index
    %10 = vector.load %arg6[%c0_9, %c0_10, %c0_11] : memref<1x32x32xbf16, #tpu.memory_space<vmem>>, vector<1x32x32xbf16>
    %11 = vector.shape_cast %10 : vector<1x32x32xbf16> to vector<32x32xbf16>
    %cst = arith.constant dense<0.000000e+00> : vector<8x32xf32>
    %12 = tpu.matmul %5, %11, %cst {dimension_numbers = #tpu.dot_dimension_numbers<[1], [1], [0], [0], [0, 0, 1, 0], [], []>} : vector<8x32xbf16>, vector<32x32xbf16>, vector<8x32xf32> -> vector<8x32xf32>
    %13 = arith.index_cast %arg2 : i32 to index
    %c0_12 = arith.constant 0 : index
    %c0_13 = arith.constant 0 : index
    %14 = vector.load %arg9[%13, %c0_12, %c0_13] : memref<1x1x32xf32, #tpu.memory_space<vmem>>, vector<1x1x32xf32>
    %15 = vector.shape_cast %14 : vector<1x1x32xf32> to vector<1x32xf32>
    %16 = vector.broadcast %15 : vector<1x32xf32> to vector<8x32xf32>
    %17 = arith.addf %12, %16 : vector<8x32xf32>
    %c0_14 = arith.constant 0 : index
    %c0_15 = arith.constant 0 : index
    %c0_16 = arith.constant 0 : index
    %18 = vector.load %arg7[%c0_14, %c0_15, %c0_16] : memref<1x32x32xbf16, #tpu.memory_space<vmem>>, vector<1x32x32xbf16>
    %19 = vector.shape_cast %18 : vector<1x32x32xbf16> to vector<32x32xbf16>
    %cst_17 = arith.constant dense<0.000000e+00> : vector<8x32xf32>
    %20 = tpu.matmul %7, %19, %cst_17 {dimension_numbers = #tpu.dot_dimension_numbers<[1], [1], [0], [0], [0, 0, 1, 0], [], []>} : vector<8x32xbf16>, vector<32x32xbf16>, vector<8x32xf32> -> vector<8x32xf32>
    %21 = arith.index_cast %arg2 : i32 to index
    %c0_18 = arith.constant 0 : index
    %c0_19 = arith.constant 0 : index
    %22 = vector.load %arg10[%21, %c0_18, %c0_19] : memref<1x1x32xf32, #tpu.memory_space<vmem>>, vector<1x1x32xf32>
    %23 = vector.shape_cast %22 : vector<1x1x32xf32> to vector<1x32xf32>
    %24 = vector.broadcast %23 : vector<1x32xf32> to vector<8x32xf32>
    %25 = arith.addf %20, %24 : vector<8x32xf32>
    %c0_20 = arith.constant 0 : index
    %c0_21 = arith.constant 0 : index
    %c0_22 = arith.constant 0 : index
    %26 = vector.load %arg8[%c0_20, %c0_21, %c0_22] : memref<1x32x32xbf16, #tpu.memory_space<vmem>>, vector<1x32x32xbf16>
    %27 = vector.shape_cast %26 : vector<1x32x32xbf16> to vector<32x32xbf16>
    %cst_23 = arith.constant dense<0.000000e+00> : vector<8x32xf32>
    %28 = tpu.matmul %9, %27, %cst_23 {dimension_numbers = #tpu.dot_dimension_numbers<[1], [1], [0], [0], [0, 0, 1, 0], [], []>} : vector<8x32xbf16>, vector<32x32xbf16>, vector<8x32xf32> -> vector<8x32xf32>
    %29 = arith.index_cast %arg2 : i32 to index
    %c0_24 = arith.constant 0 : index
    %c0_25 = arith.constant 0 : index
    %30 = vector.load %arg11[%29, %c0_24, %c0_25] : memref<1x1x32xf32, #tpu.memory_space<vmem>>, vector<1x1x32xf32>
    %31 = vector.shape_cast %30 : vector<1x1x32xf32> to vector<1x32xf32>
    %32 = vector.broadcast %31 : vector<1x32xf32> to vector<8x32xf32>
    %33 = arith.addf %28, %32 : vector<8x32xf32>
    %34 = vector.shape_cast %17 : vector<8x32xf32> to vector<8x4x8xf32>
    %35 = arith.truncf %34 : vector<8x4x8xf32> to vector<8x4x8xbf16>
    %36 = vector.shape_cast %25 : vector<8x32xf32> to vector<8x4x8xf32>
    %37 = arith.truncf %36 : vector<8x4x8xf32> to vector<8x4x8xbf16>
    %38 = vector.shape_cast %33 : vector<8x32xf32> to vector<8x4x8xf32>
    %39 = arith.truncf %38 : vector<8x4x8xf32> to vector<8x4x8xbf16>
    "tpu.trace_start"() <{level = 10 : i32, message = "qgd,kgd->gqk"}> : () -> ()
    %cst_26 = arith.constant dense<0.000000e+00> : vector<4x8x8xf32>
    %40 = tpu.matmul %35, %37, %cst_26 {dimension_numbers = #tpu.dot_dimension_numbers<[2], [2], [0], [0], [0, 1, 0, 0, 1, 0], [1], [1]>} : vector<8x4x8xbf16>, vector<8x4x8xbf16>, vector<4x8x8xf32> -> vector<4x8x8xf32>
    "tpu.trace_stop"() : () -> ()
    %cst_27 = arith.constant dense<0xFF800000> : vector<4x8xf32>
    %41 = vector.multi_reduction <maximumf>, %40, %cst_27 [2] : vector<4x8x8xf32> to vector<4x8xf32>
    %42 = vector.shape_cast %41 : vector<4x8xf32> to vector<4x8x1xf32>
    %43 = vector.broadcast %42 : vector<4x8x1xf32> to vector<4x8x8xf32>
    %44 = arith.subf %40, %43 : vector<4x8x8xf32>
    %45 = math.exp %44 : vector<4x8x8xf32>
    %cst_28 = arith.constant dense<0.000000e+00> : vector<4x8xf32>
    %46 = vector.multi_reduction <add>, %45, %cst_28 [2] : vector<4x8x8xf32> to vector<4x8xf32>
    %47 = vector.shape_cast %46 : vector<4x8xf32> to vector<4x8x1xf32>
    %48 = tpu.reciprocal %47 {approx = true} : vector<4x8x1xf32> -> vector<4x8x1xf32>
    %49 = vector.broadcast %48 : vector<4x8x1xf32> to vector<4x8x8xf32>
    %50 = arith.mulf %45, %49 : vector<4x8x8xf32>
    %51 = arith.truncf %50 : vector<4x8x8xf32> to vector<4x8x8xbf16>
    "tpu.trace_start"() <{level = 10 : i32, message = "gqk,kgd->qgd"}> : () -> ()
    %cst_29 = arith.constant dense<0.000000e+00> : vector<4x8x8xf32>
    %52 = tpu.matmul %39, %51, %cst_29 {dimension_numbers = #tpu.dot_dimension_numbers<[0], [2], [2], [1], [0, 1, 0, 2, 1, 1], [1], [0]>} : vector<8x4x8xbf16>, vector<4x8x8xbf16>, vector<4x8x8xf32> -> vector<4x8x8xf32>
    %53 = tpu.transpose %52, [2, 0, 1] : vector<4x8x8xf32> -> vector<8x4x8xf32>
    "tpu.trace_stop"() : () -> ()
    %54 = vector.shape_cast %53 : vector<8x4x8xf32> to vector<8x32xf32>
    %c0_30 = arith.constant 0 : index
    %c0_31 = arith.constant 0 : index
    %55 = vector.load %arg17[%c0_30, %c0_31] : memref<8x32xf32, #tpu.memory_space<vmem>>, vector<8x32xf32>
    %56 = arith.truncf %54 : vector<8x32xf32> to vector<8x32xbf16>
    %c0_32 = arith.constant 0 : index
    %c0_33 = arith.constant 0 : index
    %c0_34 = arith.constant 0 : index
    %57 = vector.load %arg12[%c0_32, %c0_33, %c0_34] : memref<1x32x32xbf16, #tpu.memory_space<vmem>>, vector<1x32x32xbf16>
    %58 = vector.shape_cast %57 : vector<1x32x32xbf16> to vector<32x32xbf16>
    %cst_35 = arith.constant dense<0.000000e+00> : vector<8x32xf32>
    %59 = tpu.matmul %56, %58, %cst_35 {dimension_numbers = #tpu.dot_dimension_numbers<[1], [0], [0], [1], [0, 0, 1, 1], [], []>} : vector<8x32xbf16>, vector<32x32xbf16>, vector<8x32xf32> -> vector<8x32xf32>
    %60 = arith.addf %55, %59 : vector<8x32xf32>
    %c0_36 = arith.constant 0 : index
    %c0_37 = arith.constant 0 : index
    %61 = vector.load %arg17[%c0_36, %c0_37] : memref<8x32xf32, #tpu.memory_space<vmem>>, vector<8x32xf32>
    tpu.vector_store %arg17[%c0_36, %c0_37], %60 {strides = array<i32>} : memref<8x32xf32, #tpu.memory_space<vmem>>, vector<8x32xf32>,
    %c0_i32_38 = arith.constant 0 : i32
    %62 = arith.cmpi eq, %arg2, %c0_i32_38 : i32
    %63 = arith.extui %62 : i1 to i32
    %c0_i32_39 = arith.constant 0 : i32
    %64 = arith.cmpi ne, %63, %c0_i32_39 : i32
    scf.if %64 {
      %c0_40 = arith.constant 0 : index
      %c0_41 = arith.constant 0 : index
      %65 = vector.load %arg17[%c0_40, %c0_41] : memref<8x32xf32, #tpu.memory_space<vmem>>, vector<8x32xf32>
      %66 = arith.addf %4, %65 : vector<8x32xf32>
      %c0_42 = arith.constant 0 : index
      %c0_43 = arith.constant 0 : index
      %67 = vector.load %arg13[%c0_42, %c0_43] : memref<1x32xf32, #tpu.memory_space<vmem>>, vector<1x32xf32>
      %68 = vector.broadcast %67 : vector<1x32xf32> to vector<8x32xf32>
      %69 = arith.addf %66, %68 : vector<8x32xf32>
      %cst_44 = arith.constant dense<0.000000e+00> : vector<8xf32>
      %70 = vector.multi_reduction <add>, %69, %cst_44 [1] : vector<8x32xf32> to vector<8xf32>
      %71 = vector.shape_cast %70 : vector<8xf32> to vector<8x1xf32>
      %cst_45 = arith.constant 3.200000e+01 : f32
      %72 = vector.broadcast %cst_45 : f32 to vector<8x1xf32>
      %73 = arith.divf %71, %72 : vector<8x1xf32>
      %74 = vector.broadcast %73 : vector<8x1xf32> to vector<8x32xf32>
      %75 = arith.subf %69, %74 : vector<8x32xf32>
      %76 = arith.mulf %75, %75 : vector<8x32xf32>
      %cst_46 = arith.constant dense<0.000000e+00> : vector<8xf32>
      %77 = vector.multi_reduction <add>, %76, %cst_46 [1] : vector<8x32xf32> to vector<8xf32>
      %78 = vector.shape_cast %77 : vector<8xf32> to vector<8x1xf32>
      %cst_47 = arith.constant 3.200000e+01 : f32
      %79 = vector.broadcast %cst_47 : f32 to vector<8x1xf32>
      %80 = arith.divf %78, %79 : vector<8x1xf32>
      %81 = vector.broadcast %73 : vector<8x1xf32> to vector<8x32xf32>
      %82 = arith.subf %69, %81 : vector<8x32xf32>
      %cst_48 = arith.constant 9.99999974E-6 : f32
      %83 = vector.broadcast %cst_48 : f32 to vector<8x1xf32>
      %84 = arith.addf %80, %83 : vector<8x1xf32>
      %85 = math.rsqrt %84 : vector<8x1xf32>
      %86 = vector.broadcast %85 : vector<8x1xf32> to vector<8x32xf32>
      %87 = arith.mulf %82, %86 : vector<8x32xf32>
      %c0_49 = arith.constant 0 : index
      %c0_50 = arith.constant 0 : index
      %88 = vector.load %arg14[%c0_49, %c0_50] : memref<1x32xf32, #tpu.memory_space<vmem>>, vector<1x32xf32>
      %89 = vector.broadcast %88 : vector<1x32xf32> to vector<8x32xf32>
      %90 = arith.mulf %87, %89 : vector<8x32xf32>
      %c0_51 = arith.constant 0 : index
      %c0_52 = arith.constant 0 : index
      %91 = vector.load %arg15[%c0_51, %c0_52] : memref<1x32xf32, #tpu.memory_space<vmem>>, vector<1x32xf32>
      %92 = vector.broadcast %91 : vector<1x32xf32> to vector<8x32xf32>
      %93 = arith.addf %90, %92 : vector<8x32xf32>
      %c0_53 = arith.constant 0 : index
      %c0_54 = arith.constant 0 : index
      %c0_55 = arith.constant 0 : index
      %94 = vector.load %arg16[%c0_53, %c0_54, %c0_55] : memref<1x8x32xf32, #tpu.memory_space<vmem>>, vector<1x8x32xf32>
      %95 = vector.shape_cast %94 : vector<1x8x32xf32> to vector<8x32xf32>
      %96 = vector.shape_cast %93 : vector<8x32xf32> to vector<1x8x32xf32>
      tpu.vector_store %arg16[%c0_53, %c0_54, %c0_55], %96 {strides = array<i32>} : memref<1x8x32xf32, #tpu.memory_space<vmem>>, vector<1x8x32xf32>,
    } else {
    }
    return
  }
  func.func @transform_0(%arg0: i32, %arg1: i32, %arg2: i32) -> (i32, i32, i32) {
    %c0_i32 = arith.constant 0 : i32
    %c0_i32_0 = arith.constant 0 : i32
    return %arg0, %arg1, %c0_i32 : i32, i32, i32
  }
  func.func @transform_1(%arg0: i32, %arg1: i32, %arg2: i32) -> (i32, i32, i32) {
    %c0_i32 = arith.constant 0 : i32
    %c0_i32_0 = arith.constant 0 : i32
    %c0_i32_1 = arith.constant 0 : i32
    return %arg0, %c0_i32, %c0_i32_0 : i32, i32, i32
  }
  func.func @transform_2(%arg0: i32, %arg1: i32, %arg2: i32) -> (i32, i32, i32) {
    %c0_i32 = arith.constant 0 : i32
    %c0_i32_0 = arith.constant 0 : i32
    %c0_i32_1 = arith.constant 0 : i32
    return %arg0, %c0_i32, %c0_i32_0 : i32, i32, i32
  }
  func.func @transform_3(%arg0: i32, %arg1: i32, %arg2: i32) -> (i32, i32, i32) {
    %c0_i32 = arith.constant 0 : i32
    %c0_i32_0 = arith.constant 0 : i32
    %c0_i32_1 = arith.constant 0 : i32
    return %arg2, %c0_i32, %c0_i32_0 : i32, i32, i32
  }
  func.func @transform_4(%arg0: i32, %arg1: i32, %arg2: i32) -> (i32, i32, i32) {
    %c0_i32 = arith.constant 0 : i32
    %c0_i32_0 = arith.constant 0 : i32
    %c0_i32_1 = arith.constant 0 : i32
    return %arg2, %c0_i32, %c0_i32_0 : i32, i32, i32
  }
  func.func @transform_5(%arg0: i32, %arg1: i32, %arg2: i32) -> (i32, i32, i32) {
    %c0_i32 = arith.constant 0 : i32
    %c0_i32_0 = arith.constant 0 : i32
    %c0_i32_1 = arith.constant 0 : i32
    return %arg2, %c0_i32, %c0_i32_0 : i32, i32, i32
  }
  func.func @transform_6(%arg0: i32, %arg1: i32, %arg2: i32) -> (i32, i32, i32) {
    %c0_i32 = arith.constant 0 : i32
    %c0_i32_0 = arith.constant 0 : i32
    %c0_i32_1 = arith.constant 0 : i32
    %c0_i32_2 = arith.constant 0 : i32
    return %c0_i32, %c0_i32_0, %c0_i32_1 : i32, i32, i32
  }
  func.func @transform_7(%arg0: i32, %arg1: i32, %arg2: i32) -> (i32, i32, i32) {
    %c0_i32 = arith.constant 0 : i32
    %c0_i32_0 = arith.constant 0 : i32
    %c0_i32_1 = arith.constant 0 : i32
    %c0_i32_2 = arith.constant 0 : i32
    return %c0_i32, %c0_i32_0, %c0_i32_1 : i32, i32, i32
  }
  func.func @transform_8(%arg0: i32, %arg1: i32, %arg2: i32) -> (i32, i32, i32) {
    %c0_i32 = arith.constant 0 : i32
    %c0_i32_0 = arith.constant 0 : i32
    %c0_i32_1 = arith.constant 0 : i32
    %c0_i32_2 = arith.constant 0 : i32
    return %c0_i32, %c0_i32_0, %c0_i32_1 : i32, i32, i32
  }
  func.func @transform_9(%arg0: i32, %arg1: i32, %arg2: i32) -> (i32, i32, i32) {
    %c0_i32 = arith.constant 0 : i32
    %c0_i32_0 = arith.constant 0 : i32
    %c0_i32_1 = arith.constant 0 : i32
    return %arg2, %c0_i32, %c0_i32_0 : i32, i32, i32
  }
  func.func @transform_10(%arg0: i32, %arg1: i32, %arg2: i32) -> (i32, i32) {
    %c0_i32 = arith.constant 0 : i32
    %c0_i32_0 = arith.constant 0 : i32
    %c0_i32_1 = arith.constant 0 : i32
    return %c0_i32, %c0_i32_0 : i32, i32
  }
  func.func @transform_11(%arg0: i32, %arg1: i32, %arg2: i32) -> (i32, i32) {
    %c0_i32 = arith.constant 0 : i32
    %c0_i32_0 = arith.constant 0 : i32
    %c0_i32_1 = arith.constant 0 : i32
    return %c0_i32, %c0_i32_0 : i32, i32
  }
  func.func @transform_12(%arg0: i32, %arg1: i32, %arg2: i32) -> (i32, i32) {
    %c0_i32 = arith.constant 0 : i32
    %c0_i32_0 = arith.constant 0 : i32
    %c0_i32_1 = arith.constant 0 : i32
    return %c0_i32, %c0_i32_0 : i32, i32
  }
  func.func @transform_13(%arg0: i32, %arg1: i32, %arg2: i32) -> (i32, i32, i32) {
    %c0_i32 = arith.constant 0 : i32
    %c0_i32_0 = arith.constant 0 : i32
    return %arg0, %arg1, %c0_i32 : i32, i32, i32
  }
}

</mosaic_0001>

<llo_original>
// kernel: tpu_custom_call.1
$region0: #{tpu_custom_call.1}
  #allocation0 [shape = 'u32[]', space=smem, size = 0x4, offset = 0x4, fixed_abs, tag = 'smem constant byte address 0x4 - core index']
  #allocation1 [shape = 'u32[144,128]{1,0:T(1,128)}', space=vmem, size = 0x12000, scoped, tag = 'internal scratch']
  #allocation2 [shape = 'f32[8,32]{1,0:T(8,128)}', space=vmem, size = 0x1000, scoped, tag = 'scratch operand']
  %s0 = inlined_call_operand.hbm [shape: f32[2,8,32], index: 0, kind: input, shape index: {}]
  %s1 = inlined_call_operand.hbm [shape: bf16[2,8,32], index: 1, kind: input, shape index: {}]
  %s2 = inlined_call_operand.hbm [shape: bf16[2,8,32], index: 2, kind: input, shape index: {}]
  %s3 = inlined_call_operand.hbm [shape: bf16[1,32,32], index: 3, kind: input, shape index: {}]
  %s4 = inlined_call_operand.hbm [shape: bf16[1,32,32], index: 4, kind: input, shape index: {}]
  %s5 = inlined_call_operand.hbm [shape: bf16[1,32,32], index: 5, kind: input, shape index: {}]
  %s6 = inlined_call_operand.hbm [shape: f32[1,1,32], index: 6, kind: input, shape index: {}]
  %s7 = inlined_call_operand.hbm [shape: f32[1,1,32], index: 7, kind: input, shape index: {}]
  %s8 = inlined_call_operand.hbm [shape: f32[1,1,32], index: 8, kind: input, shape index: {}]
  %s9 = inlined_call_operand.vmem [shape: bf16[1,32,32], index: 9, kind: input, shape index: {}]
  %s10 = inlined_call_operand.vmem [shape: f32[1,32], index: 10, kind: input, shape index: {}]
  %s11 = inlined_call_operand.vmem [shape: f32[1,32], index: 11, kind: input, shape index: {}]
  %s12 = inlined_call_operand.vmem [shape: f32[1,32], index: 12, kind: input, shape index: {}]
  %s13 = inlined_call_operand.hbm [shape: f32[2,8,32], index: 13, kind: output, shape index: {}]
  %s14 = sld [smem:[#allocation0]]
  $region129: #{tpu_custom_call.1} parent=0
    _
  %s16 = ssub.s32 1, %s14
  %s17 = scalar_select 0, %s16, %s14
  $region1: #{tpu_custom_call.1} parent=0
    #allocation3 [shape = 'u8[8192]{0}', space=vmem, size = 0x2000, scoped, tag = 'input window, operand 0']
    #allocation4 [shape = 's32[2]{0}', space=sflag, size = 0x8, scoped, tag = 'scoped memory for tpu_custom_call.1']
    #allocation5 [shape = 's32[2]{0}', space=sflag, size = 0x8, scoped, tag = 'scoped memory for tpu_custom_call.1']
    #allocation6 [shape = 'u8[4096]{0}', space=vmem, size = 0x1000, scoped, tag = 'input window, operand 1']
    #allocation7 [shape = 's32[2]{0}', space=sflag, size = 0x8, scoped, tag = 'scoped memory for tpu_custom_call.1']
    #allocation8 [shape = 'u8[4096]{0}', space=vmem, size = 0x1000, scoped, tag = 'input window, operand 2']
    #allocation9 [shape = 'u8[8192]{0}', space=vmem, size = 0x2000, scoped, tag = 'input window, operand 3, single buffered']
    #allocation10 [shape = 's32[1]{0}', space=sflag, size = 0x4, scoped, tag = 'scoped memory for tpu_custom_call.1']
    #allocation11 [shape = 'u8[8192]{0}', space=vmem, size = 0x2000, scoped, tag = 'input window, operand 4, single buffered']
    #allocation12 [shape = 'u8[8192]{0}', space=vmem, size = 0x2000, scoped, tag = 'input window, operand 5, single buffered']
    #allocation13 [shape = 's32[1]{0}', space=sflag, size = 0x4, scoped, tag = 'scoped memory for tpu_custom_call.1']
    #allocation14 [shape = 'u8[512]{0}', space=vmem, size = 0x400, scoped, tag = 'input window, operand 6, single buffered']
    #allocation15 [shape = 'u8[512]{0}', space=vmem, size = 0x400, scoped, tag = 'input window, operand 7, single buffered']
    #allocation16 [shape = 's32[1]{0}', space=sflag, size = 0x4, scoped, tag = 'scoped memory for tpu_custom_call.1']
    #allocation17 [shape = 'u8[512]{0}', space=vmem, size = 0x400, scoped, tag = 'input window, operand 8, single buffered']
    #allocation18 [shape = 'u8[8192]{0}', space=vmem, size = 0x2000, scoped, tag = 'output window, operand 0']
    %18 = vsyncpa [#allocation4], 0
    %s19 = scalar_lea.sflag [#allocation4], 1
    %20 = vsyncpa %s19, 0
    %21 = vsyncpa [#allocation7], 0
    %s22 = scalar_lea.sflag [#allocation7], 1
    %23 = vsyncpa %s22, 0
    %24 = vsyncpa [#allocation10], 0
    %25 = vsyncpa [#allocation13], 0
    %26 = vsyncpa [#allocation16], 0
    %27 = vsyncpa [#allocation5], 0
    %s28 = scalar_lea.sflag [#allocation5], 1
    %29 = vsyncpa %s28, 0
    loop: start=0, step=1, limit=4
    $region2: #{tpu_custom_call.1} parent=1 // loop_pre_header
      _
    $region3: #{tpu_custom_call.1} parent=1 // loop_header
      %s31 = sphi 0, %s35
      %p32 = scmp.ge.s32.totalorder %s31, 4
      %s38 = sphi 0, %s57
      %s39 = sphi 0, %s53
      %s40 = sphi 0, %s49
      %s41 = sphi 0, %s38
      %s42 = sphi 0, %s39
      %s43 = sphi 0, %s40
      %s44 = sphi 0, %s41
      %s45 = sphi 0, %s42
      %s46 = sphi 0, %s43
      %s62 = sphi 0, %s64
      %s65 = sphi 0, %s62
      %s66 = sphi 0, %s65
      %s82 = sphi 0, %s66
      %s88 = sphi 0, %s90
      %s91 = sphi 0, %s88
      %s92 = sphi 0, %s91
      %s108 = sphi 0, %s92
      %s114 = sphi 0, %s116
      %s117 = sphi 0, %s114
      %s118 = sphi 0, %s117
      %s134 = sphi 0, %s118
      %s140 = sphi 0, %s142
      %s143 = sphi 0, %s140
      %s144 = sphi 0, %s143
      %s160 = sphi 0, %s144
      %s166 = sphi 0, %s168
      %s169 = sphi 0, %s166
      %s170 = sphi 0, %s169
      %s186 = sphi 0, %s170
      %s192 = sphi 0, %s194
      %s195 = sphi 0, %s192
      %s196 = sphi 0, %s195
      %s212 = sphi 0, %s196
      %s216 = sphi 0, %s216
      %s218 = sphi 0, %s216
      %s219 = sphi 0, %s218
      %s233 = sphi 0, %s219
      %s237 = sphi 0, %s237
      %s239 = sphi 0, %s237
      %s240 = sphi 0, %s239
      %s254 = sphi 0, %s240
      %s258 = sphi 0, %s258
      %s260 = sphi 0, %s258
      %s261 = sphi 0, %s260
      %s275 = sphi 0, %s261
      %s281 = sphi 0, %s283
      %s284 = sphi 0, %s281
      %s285 = sphi 0, %s284
      %s301 = sphi 0, %s285
      %s305 = sphi 0, %s305
      %s307 = sphi 0, %s305
      %s308 = sphi 0, %s307
      %s322 = sphi 0, %s308
      %s326 = sphi 0, %s326
      %s328 = sphi 0, %s326
      %s329 = sphi 0, %s328
      %s343 = sphi 0, %s329
      %s347 = sphi 0, %s347
      %s349 = sphi 0, %s347
      %s350 = sphi 0, %s349
      %s364 = sphi 0, %s350
      %s372 = sphi 0, %s374
      %s375 = sphi 0, %s372
      %s376 = sphi 0, %s375
      %s392 = sphi 0, %s376
    $region4: #{tpu_custom_call.1} parent=1 // loop_header_branch
      %34 = sbr.rel (%p32) target = $region8
    $region5: #{tpu_custom_call.1} parent=1 // loop_body
      %s36 = ssub.s32 %s31, 1
      %s37 = ssub.s32 %s31, 2
      %s47 = sadd.s32 1, %s40
      %p48 = scmp.ge.s32.totalorder %s47, 1
      %s49 = scalar_select %p48, 0, %s47
      %s50 = sadd.s32 1, %s39
      %s51 = scalar_select %p48, %s50, %s39
      %p52 = scmp.ge.s32.totalorder %s51, 1
      %s53 = scalar_select %p52, 0, %s51
      %s54 = sadd.s32 1, %s38
      %s55 = scalar_select %p52, %s54, %s38
      %p56 = scmp.ge.s32.totalorder %s55, 2
      %s57 = scalar_select %p56, 0, %s55
      %s58 = ssub.s32 %s38, %s57
      %s59 = ssub.s32 %s39, %s53
      %s60 = sor.u32 %s58, %s59
      %p61 = scmp.eq.s32.totalorder %s60, 0
      %s63 = sadd.s32 %s62, 1
      %s64 = scalar_select %p61, %s62, %s63
      %p67 = pneg %p61
      %p68 = scmp.eq.s32.totalorder %s31, 1
      %p69 = por %p67, %p68
      %p70 = scmp.ne.s32.totalorder %s62, %s65
      %p71 = scmp.eq.s32.totalorder %s31, 0
      %p72 = por %p70, %p71
      %p73 = scmp.ne.s32.totalorder %s62, %s65
      %p74 = scmp.eq.s32.totalorder %s36, 1
      %p75 = por %p73, %p74
      %p76 = scmp.ne.s32.totalorder %s65, %s66
      %p77 = scmp.eq.s32.totalorder %s36, 0
      %p78 = por %p76, %p77
      %p79 = scmp.ne.s32.totalorder %s65, %s66
      %p80 = scmp.eq.s32.totalorder %s37, 1
      %p81 = por %p79, %p80
      %p83 = scmp.ne.s32.totalorder %s66, %s82
      %p84 = scmp.eq.s32.totalorder %s37, 0
      %p85 = por %p83, %p84
      %s86 = ssub.s32 %s38, %s57
      %p87 = scmp.eq.s32.totalorder %s86, 0
      %s89 = sadd.s32 %s88, 1
      %s90 = scalar_select %p87, %s88, %s89
      %p93 = pneg %p87
      %p94 = scmp.eq.s32.totalorder %s31, 1
      %p95 = por %p93, %p94
      %p96 = scmp.ne.s32.totalorder %s88, %s91
      %p97 = scmp.eq.s32.totalorder %s31, 0
      %p98 = por %p96, %p97
      %p99 = scmp.ne.s32.totalorder %s88, %s91
      %p100 = scmp.eq.s32.totalorder %s36, 1
      %p101 = por %p99, %p100
      %p102 = scmp.ne.s32.totalorder %s91, %s92
      %p103 = scmp.eq.s32.totalorder %s36, 0
      %p104 = por %p102, %p103
      %p105 = scmp.ne.s32.totalorder %s91, %s92
      %p106 = scmp.eq.s32.totalorder %s37, 1
      %p107 = por %p105, %p106
      %p109 = scmp.ne.s32.totalorder %s92, %s108
      %p110 = scmp.eq.s32.totalorder %s37, 0
      %p111 = por %p109, %p110
      %s112 = ssub.s32 %s38, %s57
      %p113 = scmp.eq.s32.totalorder %s112, 0
      %s115 = sadd.s32 %s114, 1
      %s116 = scalar_select %p113, %s114, %s115
      %p119 = pneg %p113
      %p120 = scmp.eq.s32.totalorder %s31, 1
      %p121 = por %p119, %p120
      %p122 = scmp.ne.s32.totalorder %s114, %s117
      %p123 = scmp.eq.s32.totalorder %s31, 0
      %p124 = por %p122, %p123
      %p125 = scmp.ne.s32.totalorder %s114, %s117
      %p126 = scmp.eq.s32.totalorder %s36, 1
      %p127 = por %p125, %p126
      %p128 = scmp.ne.s32.totalorder %s117, %s118
      %p129 = scmp.eq.s32.totalorder %s36, 0
      %p130 = por %p128, %p129
      %p131 = scmp.ne.s32.totalorder %s117, %s118
      %p132 = scmp.eq.s32.totalorder %s37, 1
      %p133 = por %p131, %p132
      %p135 = scmp.ne.s32.totalorder %s118, %s134
      %p136 = scmp.eq.s32.totalorder %s37, 0
      %p137 = por %p135, %p136
      %s138 = ssub.s32 %s40, %s49
      %p139 = scmp.eq.s32.totalorder %s138, 0
      %s141 = sadd.s32 %s140, 1
      %s142 = scalar_select %p139, %s140, %s141
      %p145 = pneg %p139
      %p146 = scmp.eq.s32.totalorder %s31, 1
      %p147 = por %p145, %p146
      %p148 = scmp.ne.s32.totalorder %s140, %s143
      %p149 = scmp.eq.s32.totalorder %s31, 0
      %p150 = por %p148, %p149
      %p151 = scmp.ne.s32.totalorder %s140, %s143
      %p152 = scmp.eq.s32.totalorder %s36, 1
      %p153 = por %p151, %p152
      %p154 = scmp.ne.s32.totalorder %s143, %s144
      %p155 = scmp.eq.s32.totalorder %s36, 0
      %p156 = por %p154, %p155
      %p157 = scmp.ne.s32.totalorder %s143, %s144
      %p158 = scmp.eq.s32.totalorder %s37, 1
      %p159 = por %p157, %p158
      %p161 = scmp.ne.s32.totalorder %s144, %s160
      %p162 = scmp.eq.s32.totalorder %s37, 0
      %p163 = por %p161, %p162
      %s164 = ssub.s32 %s40, %s49
      %p165 = scmp.eq.s32.totalorder %s164, 0
      %s167 = sadd.s32 %s166, 1
      %s168 = scalar_select %p165, %s166, %s167
      %p171 = pneg %p165
      %p172 = scmp.eq.s32.totalorder %s31, 1
      %p173 = por %p171, %p172
      %p174 = scmp.ne.s32.totalorder %s166, %s169
      %p175 = scmp.eq.s32.totalorder %s31, 0
      %p176 = por %p174, %p175
      %p177 = scmp.ne.s32.totalorder %s166, %s169
      %p178 = scmp.eq.s32.totalorder %s36, 1
      %p179 = por %p177, %p178
      %p180 = scmp.ne.s32.totalorder %s169, %s170
      %p181 = scmp.eq.s32.totalorder %s36, 0
      %p182 = por %p180, %p181
      %p183 = scmp.ne.s32.totalorder %s169, %s170
      %p184 = scmp.eq.s32.totalorder %s37, 1
      %p185 = por %p183, %p184
      %p187 = scmp.ne.s32.totalorder %s170, %s186
      %p188 = scmp.eq.s32.totalorder %s37, 0
      %p189 = por %p187, %p188
      %s190 = ssub.s32 %s40, %s49
      %p191 = scmp.eq.s32.totalorder %s190, 0
      %s193 = sadd.s32 %s192, 1
      %s194 = scalar_select %p191, %s192, %s193
      %p197 = pneg %p191
      %p198 = scmp.eq.s32.totalorder %s31, 1
      %p199 = por %p197, %p198
      %p200 = scmp.ne.s32.totalorder %s192, %s195
      %p201 = scmp.eq.s32.totalorder %s31, 0
      %p202 = por %p200, %p201
      %p203 = scmp.ne.s32.totalorder %s192, %s195
      %p204 = scmp.eq.s32.totalorder %s36, 1
      %p205 = por %p203, %p204
      %p206 = scmp.ne.s32.totalorder %s195, %s196
      %p207 = scmp.eq.s32.totalorder %s36, 0
      %p208 = por %p206, %p207
      %p209 = scmp.ne.s32.totalorder %s195, %s196
      %p210 = scmp.eq.s32.totalorder %s37, 1
      %p211 = por %p209, %p210
      %p213 = scmp.ne.s32.totalorder %s196, %s212
      %p214 = scmp.eq.s32.totalorder %s37, 0
      %p215 = por %p213, %p214
      %s217 = sadd.s32 %s216, 1
      %p220 = scmp.eq.s32.totalorder %s31, 1
      %p221 = scmp.ne.s32.totalorder %s216, %s218
      %p222 = scmp.eq.s32.totalorder %s31, 0
      %p223 = por %p221, %p222
      %p224 = scmp.ne.s32.totalorder %s216, %s218
      %p225 = scmp.eq.s32.totalorder %s36, 1
      %p226 = por %p224, %p225
      %p227 = scmp.ne.s32.totalorder %s218, %s219
      %p228 = scmp.eq.s32.totalorder %s36, 0
      %p229 = por %p227, %p228
      %p230 = scmp.ne.s32.totalorder %s218, %s219
      %p231 = scmp.eq.s32.totalorder %s37, 1
      %p232 = por %p230, %p231
      %p234 = scmp.ne.s32.totalorder %s219, %s233
      %p235 = scmp.eq.s32.totalorder %s37, 0
      %p236 = por %p234, %p235
      %s238 = sadd.s32 %s237, 1
      %p241 = scmp.eq.s32.totalorder %s31, 1
      %p242 = scmp.ne.s32.totalorder %s237, %s239
      %p243 = scmp.eq.s32.totalorder %s31, 0
      %p244 = por %p242, %p243
      %p245 = scmp.ne.s32.totalorder %s237, %s239
      %p246 = scmp.eq.s32.totalorder %s36, 1
      %p247 = por %p245, %p246
      %p248 = scmp.ne.s32.totalorder %s239, %s240
      %p249 = scmp.eq.s32.totalorder %s36, 0
      %p250 = por %p248, %p249
      %p251 = scmp.ne.s32.totalorder %s239, %s240
      %p252 = scmp.eq.s32.totalorder %s37, 1
      %p253 = por %p251, %p252
      %p255 = scmp.ne.s32.totalorder %s240, %s254
      %p256 = scmp.eq.s32.totalorder %s37, 0
      %p257 = por %p255, %p256
      %s259 = sadd.s32 %s258, 1
      %p262 = scmp.eq.s32.totalorder %s31, 1
      %p263 = scmp.ne.s32.totalorder %s258, %s260
      %p264 = scmp.eq.s32.totalorder %s31, 0
      %p265 = por %p263, %p264
      %p266 = scmp.ne.s32.totalorder %s258, %s260
      %p267 = scmp.eq.s32.totalorder %s36, 1
      %p268 = por %p266, %p267
      %p269 = scmp.ne.s32.totalorder %s260, %s261
      %p270 = scmp.eq.s32.totalorder %s36, 0
      %p271 = por %p269, %p270
      %p272 = scmp.ne.s32.totalorder %s260, %s261
      %p273 = scmp.eq.s32.totalorder %s37, 1
      %p274 = por %p272, %p273
      %p276 = scmp.ne.s32.totalorder %s261, %s275
      %p277 = scmp.eq.s32.totalorder %s37, 0
      %p278 = por %p276, %p277
      %s279 = ssub.s32 %s40, %s49
      %p280 = scmp.eq.s32.totalorder %s279, 0
      %s282 = sadd.s32 %s281, 1
      %s283 = scalar_select %p280, %s281, %s282
      %p286 = pneg %p280
      %p287 = scmp.eq.s32.totalorder %s31, 1
      %p288 = por %p286, %p287
      %p289 = scmp.ne.s32.totalorder %s281, %s284
      %p290 = scmp.eq.s32.totalorder %s31, 0
      %p291 = por %p289, %p290
      %p292 = scmp.ne.s32.totalorder %s281, %s284
      %p293 = scmp.eq.s32.totalorder %s36, 1
      %p294 = por %p292, %p293
      %p295 = scmp.ne.s32.totalorder %s284, %s285
      %p296 = scmp.eq.s32.totalorder %s36, 0
      %p297 = por %p295, %p296
      %p298 = scmp.ne.s32.totalorder %s284, %s285
      %p299 = scmp.eq.s32.totalorder %s37, 1
      %p300 = por %p298, %p299
      %p302 = scmp.ne.s32.totalorder %s285, %s301
      %p303 = scmp.eq.s32.totalorder %s37, 0
      %p304 = por %p302, %p303
      %s306 = sadd.s32 %s305, 1
      %p309 = scmp.eq.s32.totalorder %s31, 1
      %p310 = scmp.ne.s32.totalorder %s305, %s307
      %p311 = scmp.eq.s32.totalorder %s31, 0
      %p312 = por %p310, %p311
      %p313 = scmp.ne.s32.totalorder %s305, %s307
      %p314 = scmp.eq.s32.totalorder %s36, 1
      %p315 = por %p313, %p314
      %p316 = scmp.ne.s32.totalorder %s307, %s308
      %p317 = scmp.eq.s32.totalorder %s36, 0
      %p318 = por %p316, %p317
      %p319 = scmp.ne.s32.totalorder %s307, %s308
      %p320 = scmp.eq.s32.totalorder %s37, 1
      %p321 = por %p319, %p320
      %p323 = scmp.ne.s32.totalorder %s308, %s322
      %p324 = scmp.eq.s32.totalorder %s37, 0
      %p325 = por %p323, %p324
      %s327 = sadd.s32 %s326, 1
      %p330 = scmp.eq.s32.totalorder %s31, 1
      %p331 = scmp.ne.s32.totalorder %s326, %s328
      %p332 = scmp.eq.s32.totalorder %s31, 0
      %p333 = por %p331, %p332
      %p334 = scmp.ne.s32.totalorder %s326, %s328
      %p335 = scmp.eq.s32.totalorder %s36, 1
      %p336 = por %p334, %p335
      %p337 = scmp.ne.s32.totalorder %s328, %s329
      %p338 = scmp.eq.s32.totalorder %s36, 0
      %p339 = por %p337, %p338
      %p340 = scmp.ne.s32.totalorder %s328, %s329
      %p341 = scmp.eq.s32.totalorder %s37, 1
      %p342 = por %p340, %p341
      %p344 = scmp.ne.s32.totalorder %s329, %s343
      %p345 = scmp.eq.s32.totalorder %s37, 0
      %p346 = por %p344, %p345
      %s348 = sadd.s32 %s347, 1
      %p351 = scmp.eq.s32.totalorder %s31, 1
      %p352 = scmp.ne.s32.totalorder %s347, %s349
      %p353 = scmp.eq.s32.totalorder %s31, 0
      %p354 = por %p352, %p353
      %p355 = scmp.ne.s32.totalorder %s347, %s349
      %p356 = scmp.eq.s32.totalorder %s36, 1
      %p357 = por %p355, %p356
      %p358 = scmp.ne.s32.totalorder %s349, %s350
      %p359 = scmp.eq.s32.totalorder %s36, 0
      %p360 = por %p358, %p359
      %p361 = scmp.ne.s32.totalorder %s349, %s350
      %p362 = scmp.eq.s32.totalorder %s37, 1
      %p363 = por %p361, %p362
      %p365 = scmp.ne.s32.totalorder %s350, %s364
      %p366 = scmp.eq.s32.totalorder %s37, 0
      %p367 = por %p365, %p366
      %s368 = ssub.s32 %s38, %s57
      %s369 = ssub.s32 %s39, %s53
      %s370 = sor.u32 %s368, %s369
      %p371 = scmp.eq.s32.totalorder %s370, 0
      %s373 = sadd.s32 %s372, 1
      %s374 = scalar_select %p371, %s372, %s373
      %p377 = pneg %p371
      %p378 = scmp.eq.s32.totalorder %s31, 1
      %p379 = por %p377, %p378
      %p380 = scmp.ne.s32.totalorder %s372, %s375
      %p381 = scmp.eq.s32.totalorder %s31, 0
      %p382 = por %p380, %p381
      %p383 = scmp.ne.s32.totalorder %s372, %s375
      %p384 = scmp.eq.s32.totalorder %s36, 1
      %p385 = por %p383, %p384
      %p386 = scmp.ne.s32.totalorder %s375, %s376
      %p387 = scmp.eq.s32.totalorder %s36, 0
      %p388 = por %p386, %p387
      %p389 = scmp.ne.s32.totalorder %s375, %s376
      %p390 = scmp.eq.s32.totalorder %s37, 1
      %p391 = por %p389, %p390
      %p393 = scmp.ne.s32.totalorder %s376, %s392
      %p394 = scmp.eq.s32.totalorder %s37, 0
      %p395 = por %p393, %p394
      %p396 = scmp.le.s32.totalorder 1, %s31
      %p397 = scmp.lt.s32.totalorder %s31, 3
      %p398 = pnand %p396, %p397
      %p399 = pneg %p398
      // Predicated region
      $region9: #{tpu_custom_call.1} parent=5 // pred_check
        _
      $region10: #{tpu_custom_call.1} parent=5 // pred_check_branch
        %401 = sbr.rel (%p398) target = $region12
      $region11: #{tpu_custom_call.1} parent=5 // pred_region
        %s402 = ssub.s32 %s31, 1
        // Predicated region
        $region13: #{tpu_custom_call.1} parent=11 // pred_check
          %p403 = pneg %p156
        $region14: #{tpu_custom_call.1} parent=11 // pred_check_branch
          %405 = sbr.rel (%p403) target = $region16
        $region15: #{tpu_custom_call.1} parent=11 // pred_region
          %s407 = ssub.s32 256, 256
          %408 = vsyncadd [#allocation10], %s407
          %s409 = smul.addr %s43, 4
          %s410 = smul.addr %s409, 64
          %s411 = scalar_lea.hbm %s3, %s410
          %s412 = sshll.u32 [#allocation9], 4
          %s413 = int_to_ptr.vmem [resolvable:$true] %s412
          %418 = dma.hbm_to_vmem [thread:$0]  %s411, 256, %s413, [#allocation10], 64, 64, 4
        $region16: #{tpu_custom_call.1} parent=11 // pred_fallthru
          _
        // Predicated region
        $region17: #{tpu_custom_call.1} parent=11 // pred_check
          %p419 = pneg %p182
        $region18: #{tpu_custom_call.1} parent=11 // pred_check_branch
          %421 = sbr.rel (%p419) target = $region20
        $region19: #{tpu_custom_call.1} parent=11 // pred_region
          %s423 = ssub.s32 256, 256
          %424 = vsyncadd [#allocation10], %s423
          %s425 = smul.addr %s43, 4
          %s426 = smul.addr %s425, 64
          %s427 = scalar_lea.hbm %s4, %s426
          %s428 = sshll.u32 [#allocation11], 4
          %s429 = int_to_ptr.vmem [resolvable:$true] %s428
          %434 = dma.hbm_to_vmem [thread:$0]  %s427, 256, %s429, [#allocation10], 64, 64, 4
        $region20: #{tpu_custom_call.1} parent=11 // pred_fallthru
          _
        // Predicated region
        $region21: #{tpu_custom_call.1} parent=11 // pred_check
          %p435 = pneg %p208
        $region22: #{tpu_custom_call.1} parent=11 // pred_check_branch
          %437 = sbr.rel (%p435) target = $region24
        $region23: #{tpu_custom_call.1} parent=11 // pred_region
          %s439 = ssub.s32 256, 256
          %440 = vsyncadd [#allocation13], %s439
          %s441 = smul.addr %s43, 4
          %s442 = smul.addr %s441, 64
          %s443 = scalar_lea.hbm %s5, %s442
          %s444 = sshll.u32 [#allocation12], 4
          %s445 = int_to_ptr.vmem [resolvable:$true] %s444
          %450 = dma.hbm_to_vmem [thread:$0]  %s443, 256, %s445, [#allocation13], 64, 64, 4
        $region24: #{tpu_custom_call.1} parent=11 // pred_fallthru
          _
        // Predicated region
        $region25: #{tpu_custom_call.1} parent=11 // pred_check
          %p451 = pneg %p229
        $region26: #{tpu_custom_call.1} parent=11 // pred_check_branch
          %453 = sbr.rel (%p451) target = $region28
        $region27: #{tpu_custom_call.1} parent=11 // pred_region
          %s455 = ssub.s32 16, 16
          %456 = vsyncadd [#allocation13], %s455
          %s458 = sshll.u32 [#allocation14], 4
          %s459 = int_to_ptr.vmem [resolvable:$true] %s458
          %461 = dma.hbm_to_vmem [thread:$0]  %s6, 16, %s459, [#allocation13]
        $region28: #{tpu_custom_call.1} parent=11 // pred_fallthru
          _
        // Predicated region
        $region29: #{tpu_custom_call.1} parent=11 // pred_check
          %p462 = pneg %p250
        $region30: #{tpu_custom_call.1} parent=11 // pred_check_branch
          %464 = sbr.rel (%p462) target = $region32
        $region31: #{tpu_custom_call.1} parent=11 // pred_region
          %s466 = ssub.s32 16, 16
          %467 = vsyncadd [#allocation16], %s466
          %s469 = sshll.u32 [#allocation15], 4
          %s470 = int_to_ptr.vmem [resolvable:$true] %s469
          %472 = dma.hbm_to_vmem [thread:$0]  %s7, 16, %s470, [#allocation16]
        $region32: #{tpu_custom_call.1} parent=11 // pred_fallthru
          _
        // Predicated region
        $region33: #{tpu_custom_call.1} parent=11 // pred_check
          %p473 = pneg %p271
        $region34: #{tpu_custom_call.1} parent=11 // pred_check_branch
          %475 = sbr.rel (%p473) target = $region36
        $region35: #{tpu_custom_call.1} parent=11 // pred_region
          %s477 = ssub.s32 16, 16
          %478 = vsyncadd [#allocation16], %s477
          %s480 = sshll.u32 [#allocation17], 4
          %s481 = int_to_ptr.vmem [resolvable:$true] %s480
          %483 = dma.hbm_to_vmem [thread:$0]  %s8, 16, %s481, [#allocation16]
        $region36: #{tpu_custom_call.1} parent=11 // pred_fallthru
          _
        // Predicated region
        $region37: #{tpu_custom_call.1} parent=11 // pred_check
          %p484 = pneg %p297
        $region38: #{tpu_custom_call.1} parent=11 // pred_check_branch
          %486 = sbr.rel (%p484) target = $region40
        $region39: #{tpu_custom_call.1} parent=11 // pred_region
          %p487 = scmp.lt.s32.totalorder %s43, 0
          %s488 = scalar_select %p487, %s43, 0
          %s489 = smul.addr %s488, 4
          %s490 = smul.addr %s489, 4
          %s491 = scalar_lea.vmem %s9, %s490
        $region40: #{tpu_custom_call.1} parent=11 // pred_fallthru
          _
        // Predicated region
        $region41: #{tpu_custom_call.1} parent=11 // pred_check
          %p492 = pneg %p318
        $region42: #{tpu_custom_call.1} parent=11 // pred_check_branch
          %494 = sbr.rel (%p492) target = $region44
        $region43: #{tpu_custom_call.1} parent=11 // pred_region
          _
        $region44: #{tpu_custom_call.1} parent=11 // pred_fallthru
          _
        // Predicated region
        $region45: #{tpu_custom_call.1} parent=11 // pred_check
          %p495 = pneg %p339
        $region46: #{tpu_custom_call.1} parent=11 // pred_check_branch
          %497 = sbr.rel (%p495) target = $region48
        $region47: #{tpu_custom_call.1} parent=11 // pred_region
          _
        $region48: #{tpu_custom_call.1} parent=11 // pred_fallthru
          _
        // Predicated region
        $region49: #{tpu_custom_call.1} parent=11 // pred_check
          %p498 = pneg %p360
        $region50: #{tpu_custom_call.1} parent=11 // pred_check_branch
          %500 = sbr.rel (%p498) target = $region52
        $region51: #{tpu_custom_call.1} parent=11 // pred_region
          _
        $region52: #{tpu_custom_call.1} parent=11 // pred_fallthru
          _
      $region12: #{tpu_custom_call.1} parent=5 // pred_fallthru
        _
      %p501 = scmp.lt.s32.totalorder %s31, 2
      // Predicated region
      $region53: #{tpu_custom_call.1} parent=5 // pred_check
        %p502 = pneg %p501
      $region54: #{tpu_custom_call.1} parent=5 // pred_check_branch
        %504 = sbr.rel (%p502) target = $region56
      $region55: #{tpu_custom_call.1} parent=5 // pred_region
        // Predicated region
        $region57: #{tpu_custom_call.1} parent=55 // pred_check
          %p505 = pneg %p72
        $region58: #{tpu_custom_call.1} parent=55 // pred_check_branch
          %507 = sbr.rel (%p505) target = $region60
        $region59: #{tpu_custom_call.1} parent=55 // pred_region
          %s508 = sand.u32 %s62, 1
          %s509 = scalar_lea.sflag [#allocation4], %s508
          %s510 = sand.u32 %s62, 1
          %s511 = smul.addr %s510, 8
          %s512 = scalar_lea.vmem [#allocation3], %s511
          %s514 = ssub.s32 128, 128
          %515 = vsyncadd %s509, %s514
          %s516 = sadd.s32 %s39, %s38
          %s517 = smul.addr %s516, 128
          %s518 = scalar_lea.hbm %s0, %s517
          %s520 = sshll.u32 %s512, 4
          %s521 = int_to_ptr.vmem [resolvable:$true] %s520
          %523 = dma.hbm_to_vmem [thread:$0]  %s518, 128, %s521, %s509
        $region60: #{tpu_custom_call.1} parent=55 // pred_fallthru
          _
        // Predicated region
        $region61: #{tpu_custom_call.1} parent=55 // pred_check
          %p524 = pneg %p98
        $region62: #{tpu_custom_call.1} parent=55 // pred_check_branch
          %526 = sbr.rel (%p524) target = $region64
        $region63: #{tpu_custom_call.1} parent=55 // pred_region
          %s527 = sand.u32 %s31, 1
          %s528 = scalar_lea.sflag [#allocation7], %s527
          %s529 = sand.u32 %s88, 1
          %s530 = smul.addr %s529, 4
          %s531 = scalar_lea.vmem [#allocation6], %s530
          %s533 = ssub.s32 64, 64
          %534 = vsyncadd %s528, %s533
          %s535 = smul.addr %s38, 64
          %s536 = scalar_lea.hbm %s1, %s535
          %s538 = sshll.u32 %s531, 4
          %s539 = int_to_ptr.vmem [resolvable:$true] %s538
          %541 = dma.hbm_to_vmem [thread:$0]  %s536, 64, %s539, %s528
        $region64: #{tpu_custom_call.1} parent=55 // pred_fallthru
          _
        // Predicated region
        $region65: #{tpu_custom_call.1} parent=55 // pred_check
          %p542 = pneg %p124
        $region66: #{tpu_custom_call.1} parent=55 // pred_check_branch
          %544 = sbr.rel (%p542) target = $region68
        $region67: #{tpu_custom_call.1} parent=55 // pred_region
          %s545 = sand.u32 %s31, 1
          %s546 = scalar_lea.sflag [#allocation7], %s545
          %s547 = sand.u32 %s114, 1
          %s548 = smul.addr %s547, 4
          %s549 = scalar_lea.vmem [#allocation8], %s548
          %s551 = ssub.s32 64, 64
          %552 = vsyncadd %s546, %s551
          %s553 = smul.addr %s38, 64
          %s554 = scalar_lea.hbm %s2, %s553
          %s556 = sshll.u32 %s549, 4
          %s557 = int_to_ptr.vmem [resolvable:$true] %s556
          %559 = dma.hbm_to_vmem [thread:$0]  %s554, 64, %s557, %s546
        $region68: #{tpu_custom_call.1} parent=55 // pred_fallthru
          _
      $region56: #{tpu_custom_call.1} parent=5 // pred_fallthru
        _
      %p560 = scmp.le.s32.totalorder 1, %s31
      %p561 = scmp.lt.s32.totalorder %s31, 3
      %p562 = pnand %p560, %p561
      %p563 = pneg %p562
      // Predicated region
      $region69: #{tpu_custom_call.1} parent=5 // pred_check
        _
      $region70: #{tpu_custom_call.1} parent=5 // pred_check_branch
        %565 = sbr.rel (%p562) target = $region72
      $region71: #{tpu_custom_call.1} parent=5 // pred_region
        %s566 = ssub.s32 %s31, 1
        %s567 = sand.u32 %s65, 1
        %s568 = scalar_lea.sflag [#allocation4], %s567
        %s569 = sand.u32 %s65, 1
        %s570 = smul.addr %s569, 8
        %s571 = scalar_lea.vmem [#allocation3], %s570
        // Predicated region
        $region73: #{tpu_custom_call.1} parent=71 // pred_check
          %p572 = pneg %p78
        $region74: #{tpu_custom_call.1} parent=71 // pred_check_branch
          %574 = sbr.rel (%p572) target = $region76
        $region75: #{tpu_custom_call.1} parent=71 // pred_region
          %575 = dma.done %s568, 128
        $region76: #{tpu_custom_call.1} parent=71 // pred_fallthru
          _
        %s576 = sand.u32 %s36, 1
        %s577 = scalar_lea.sflag [#allocation7], %s576
        %s578 = sand.u32 %s91, 1
        %s579 = smul.addr %s578, 4
        %s580 = scalar_lea.vmem [#allocation6], %s579
        // Predicated region
        $region77: #{tpu_custom_call.1} parent=71 // pred_check
          %p581 = pneg %p104
        $region78: #{tpu_custom_call.1} parent=71 // pred_check_branch
          %583 = sbr.rel (%p581) target = $region80
        $region79: #{tpu_custom_call.1} parent=71 // pred_region
          %584 = dma.done %s577, 64
        $region80: #{tpu_custom_call.1} parent=71 // pred_fallthru
          _
        %s585 = sand.u32 %s36, 1
        %s586 = scalar_lea.sflag [#allocation7], %s585
        %s587 = sand.u32 %s117, 1
        %s588 = smul.addr %s587, 4
        %s589 = scalar_lea.vmem [#allocation8], %s588
        // Predicated region
        $region81: #{tpu_custom_call.1} parent=71 // pred_check
          %p590 = pneg %p130
        $region82: #{tpu_custom_call.1} parent=71 // pred_check_branch
          %592 = sbr.rel (%p590) target = $region84
        $region83: #{tpu_custom_call.1} parent=71 // pred_region
          %593 = dma.done %s586, 64
        $region84: #{tpu_custom_call.1} parent=71 // pred_fallthru
          _
        // Predicated region
        $region85: #{tpu_custom_call.1} parent=71 // pred_check
          %p594 = pneg %p156
        $region86: #{tpu_custom_call.1} parent=71 // pred_check_branch
          %596 = sbr.rel (%p594) target = $region88
        $region87: #{tpu_custom_call.1} parent=71 // pred_region
          %597 = dma.done [#allocation10], 256
        $region88: #{tpu_custom_call.1} parent=71 // pred_fallthru
          _
        // Predicated region
        $region89: #{tpu_custom_call.1} parent=71 // pred_check
          %p598 = pneg %p182
        $region90: #{tpu_custom_call.1} parent=71 // pred_check_branch
          %600 = sbr.rel (%p598) target = $region92
        $region91: #{tpu_custom_call.1} parent=71 // pred_region
          %601 = dma.done [#allocation10], 256
        $region92: #{tpu_custom_call.1} parent=71 // pred_fallthru
          _
        // Predicated region
        $region93: #{tpu_custom_call.1} parent=71 // pred_check
          %p602 = pneg %p208
        $region94: #{tpu_custom_call.1} parent=71 // pred_check_branch
          %604 = sbr.rel (%p602) target = $region96
        $region95: #{tpu_custom_call.1} parent=71 // pred_region
          %605 = dma.done [#allocation13], 256
        $region96: #{tpu_custom_call.1} parent=71 // pred_fallthru
          _
        // Predicated region
        $region97: #{tpu_custom_call.1} parent=71 // pred_check
          %p606 = pneg %p229
        $region98: #{tpu_custom_call.1} parent=71 // pred_check_branch
          %608 = sbr.rel (%p606) target = $region100
        $region99: #{tpu_custom_call.1} parent=71 // pred_region
          %609 = dma.done [#allocation13], 16
        $region100: #{tpu_custom_call.1} parent=71 // pred_fallthru
          _
        // Predicated region
        $region101: #{tpu_custom_call.1} parent=71 // pred_check
          %p610 = pneg %p250
        $region102: #{tpu_custom_call.1} parent=71 // pred_check_branch
          %612 = sbr.rel (%p610) target = $region104
        $region103: #{tpu_custom_call.1} parent=71 // pred_region
          %613 = dma.done [#allocation16], 16
        $region104: #{tpu_custom_call.1} parent=71 // pred_fallthru
          _
        // Predicated region
        $region105: #{tpu_custom_call.1} parent=71 // pred_check
          %p614 = pneg %p271
        $region106: #{tpu_custom_call.1} parent=71 // pred_check_branch
          %616 = sbr.rel (%p614) target = $region108
        $region107: #{tpu_custom_call.1} parent=71 // pred_region
          %617 = dma.done [#allocation16], 16
        $region108: #{tpu_custom_call.1} parent=71 // pred_fallthru
          _
        %s618 = sand.u32 %s65, 1
        %s619 = scalar_lea.sflag [#allocation4], %s618
        %s620 = sand.u32 %s65, 1
        %s621 = smul.addr %s620, 8
        %s622 = scalar_lea.vmem [#allocation3], %s621
        %p623 = pneg %p78
        %p624 = pneg %p75
        %s625 = sand.u32 %s36, 1
        %s626 = scalar_lea.sflag [#allocation7], %s625
        %s627 = sand.u32 %s91, 1
        %s628 = smul.addr %s627, 4
        %s629 = scalar_lea.vmem [#allocation6], %s628
        %p630 = pneg %p104
        %p631 = pneg %p101
        %s632 = sand.u32 %s36, 1
        %s633 = scalar_lea.sflag [#allocation7], %s632
        %s634 = sand.u32 %s117, 1
        %s635 = smul.addr %s634, 4
        %s636 = scalar_lea.vmem [#allocation8], %s635
        %p637 = pneg %p130
        %p638 = pneg %p127
        %p639 = pneg %p156
        %p640 = pneg %p153
        %p641 = pneg %p182
        %p642 = pneg %p179
        %p643 = pneg %p208
        %p644 = pneg %p205
        %p645 = pneg %p229
        %p646 = pneg %p226
        %p647 = pneg %p250
        %p648 = pneg %p247
        %p649 = pneg %p271
        %p650 = pneg %p268
        %p651 = scmp.lt.s32.totalorder %s43, 0
        %s652 = scalar_select %p651, %s43, 0
        %s653 = smul.addr %s652, 4
        %s654 = smul.addr %s653, 4
        %s655 = scalar_lea.vmem %s9, %s654
        %p656 = pneg %p297
        %p657 = pneg %p294
        %p658 = pneg %p318
        %p659 = pneg %p315
        %p660 = pneg %p339
        %p661 = pneg %p336
        %p662 = pneg %p360
        %p663 = pneg %p357
        %p664 = pneg %p388
        %p665 = pneg %p385
        %s666 = sand.u32 %s375, 1
        %s667 = scalar_lea.sflag [#allocation5], %s666
        %s668 = sand.u32 %s375, 1
        %s669 = smul.addr %s668, 8
        %s670 = scalar_lea.vmem [#allocation18], %s669
        %p671 = scmp.lt.s32.totalorder %s43, 0
        %s672 = scalar_select %p671, %s43, 0
        %s673 = smul.addr %s672, 4
        %s674 = smul.addr %s673, 4
        %s675 = scalar_lea.vmem %s9, %s674
        %p677 = scmp.eq.s32.totalorder %s43, 0
        // Predicated region
        $region109: #{tpu_custom_call.1} parent=71 // pred_check
          %p678 = pneg %p677
        $region110: #{tpu_custom_call.1} parent=71 // pred_check_branch
          %680 = sbr.rel (%p678) target = $region112
        $region111: #{tpu_custom_call.1} parent=71 // pred_region
          %vm681 = vcmask 261120
          %682 = vst.msk [vmem:[#allocation2] sm:$0xff] %vm681, 0.0
        $region112: #{tpu_custom_call.1} parent=71 // pred_fallthru
          _
        %v683 = vld [vmem:[%s571] sm:$0xff]
        %v684 = vpack.c.bf16 %v683, %v683
        %v685 = vld [vmem:[%s580] sm:$0xf]
        %v686 = vld [vmem:[%s589] sm:$0xf]
        %v687 = vld [vmem:[#allocation9] sm:$0xf]
        %v688 = vld [vmem:[#allocation9 + $0x4] sm:$0xf]
        %v689 = vld [vmem:[#allocation9 + $0x8] sm:$0xf]
        %v690 = vld [vmem:[#allocation9 + $0xc] sm:$0xf]
        %s691 = scalar_lea.vmem [#allocation14], %s43
        %v692 = vld [vmem:[%s691] sm:$0x1]
        %v694 = vlaneseq
        %v695 = vshrl.u32 %v694, 7
        %v696 = vsub.s32 0, %v695
        %v697 = vrot.slane %v692, %v696
        %v703 = vunpack.c.l.b16 %v687
        %v704 = vunpack.c.l.b16 %v688
        %v705 = vunpack.c.l.b16 %v689
        %v706 = vunpack.c.l.b16 %v690
        %v707 = vpack.c.b16 %v704, %v703
        %v708 = vpack.c.b16 %v706, %v705
        %vm709 = vcmask 261120
        %v711 = vsel %vm709, %v684, 0
        %v714 = vsel %vm709, %v707, 0
        %v717 = vsel %vm709, %v708, 0
        %719 = vmatprep.subr.bf16.mxu0 0
        %720 = vmatpush1.bf16.xpose.msra.mxu0 0
        %721 = vmatprep.subr.bf16.mxu0 0
        %722 = vmatpush1.bf16.xpose.msra.mxu0 0
        %723 = vmatprep.subr.bf16.mxu0 0
        %724 = vmatpush1.bf16.xpose.msra.mxu0 0
        %725 = vmatprep.subr.bf16.mxu0 0
        %726 = vmatpush1.bf16.xpose.msra.mxu0 0
        %727 = vmatprep.subr.bf16.mxu0 0
        %728 = vmatpush1.bf16.xpose.msra.mxu0 0
        %729 = vmatprep.subr.bf16.mxu0 0
        %730 = vmatpush1.bf16.xpose.msra.mxu0 0
        %731 = vmatprep.subr.bf16.mxu0 0
        %732 = vmatpush1.bf16.xpose.msra.mxu0 %v717
        %733 = vmatprep.subr.bf16.mxu0 0
        %734 = vmatpush1.bf16.xpose.msra.mxu0 %v714
        %735 = vmatprep.subr.bf16.mxu0 0
        %736 = vmatpush2.bf16.xpose.msra.mxu0 0
        %737 = vmatprep.subr.bf16.mxu0 0
        %738 = vmatpush2.bf16.xpose.msra.mxu0 0
        %739 = vmatprep.subr.bf16.mxu0 0
        %740 = vmatpush2.bf16.xpose.msra.mxu0 0
        %741 = vmatprep.subr.bf16.mxu0 0
        %742 = vmatpush2.bf16.xpose.msra.mxu0 0
        %743 = vmatprep.subr.bf16.mxu0 0
        %744 = vmatpush2.bf16.xpose.msra.mxu0 0
        %745 = vmatprep.subr.bf16.mxu0 0
        %746 = vmatpush2.bf16.xpose.msra.mxu0 0
        %747 = vmatprep.subr.bf16.mxu0 0
        %748 = vmatpush2.bf16.xpose.msra.mxu0 0
        %749 = vmatprep.subr.bf16.mxu0 0
        %750 = vmatpush2.bf16.xpose.msra.mxu0 0
        %751 = vmatprep.mubr.bf16.mxu0 0
        %752 = vmatmul.mubr.bf16.gmra.mxu0 %v711
        %v753 = vpop.f32.mrf.mxu0
        %v754 = vadd.f32 %v697, %v753
        %v755 = vpop.f32.mrf.mxu0
        %v756 = vpop.f32.mrf.mxu0
        %v757 = vpop.f32.mrf.mxu0
        %758 = vdwg.mxu0
        %v759 = vld [vmem:[#allocation11] sm:$0xf]
        %v760 = vld [vmem:[#allocation11 + $0x4] sm:$0xf]
        %v761 = vld [vmem:[#allocation11 + $0x8] sm:$0xf]
        %v762 = vld [vmem:[#allocation11 + $0xc] sm:$0xf]
        %s763 = scalar_lea.vmem [#allocation15], %s43
        %v764 = vld [vmem:[%s763] sm:$0x1]
        %v766 = vlaneseq
        %v767 = vshrl.u32 %v766, 7
        %v768 = vsub.s32 0, %v767
        %v769 = vrot.slane %v764, %v768
        %v775 = vunpack.c.l.b16 %v759
        %v776 = vunpack.c.l.b16 %v760
        %v777 = vunpack.c.l.b16 %v761
        %v778 = vunpack.c.l.b16 %v762
        %v779 = vpack.c.b16 %v776, %v775
        %v780 = vpack.c.b16 %v778, %v777
        %v782 = vsel %vm709, %v685, 0
        %v785 = vsel %vm709, %v779, 0
        %v788 = vsel %vm709, %v780, 0
        %790 = vmatprep.subr.bf16.mxu0 0
        %791 = vmatpush1.bf16.xpose.msra.mxu0 0
        %792 = vmatprep.subr.bf16.mxu0 0
        %793 = vmatpush1.bf16.xpose.msra.mxu0 0
        %794 = vmatprep.subr.bf16.mxu0 0
        %795 = vmatpush1.bf16.xpose.msra.mxu0 0
        %796 = vmatprep.subr.bf16.mxu0 0
        %797 = vmatpush1.bf16.xpose.msra.mxu0 0
        %798 = vmatprep.subr.bf16.mxu0 0
        %799 = vmatpush1.bf16.xpose.msra.mxu0 0
        %800 = vmatprep.subr.bf16.mxu0 0
        %801 = vmatpush1.bf16.xpose.msra.mxu0 0
        %802 = vmatprep.subr.bf16.mxu0 0
        %803 = vmatpush1.bf16.xpose.msra.mxu0 %v788
        %804 = vmatprep.subr.bf16.mxu0 0
        %805 = vmatpush1.bf16.xpose.msra.mxu0 %v785
        %806 = vmatprep.subr.bf16.mxu0 0
        %807 = vmatpush2.bf16.xpose.msra.mxu0 0
        %808 = vmatprep.subr.bf16.mxu0 0
        %809 = vmatpush2.bf16.xpose.msra.mxu0 0
        %810 = vmatprep.subr.bf16.mxu0 0
        %811 = vmatpush2.bf16.xpose.msra.mxu0 0
        %812 = vmatprep.subr.bf16.mxu0 0
        %813 = vmatpush2.bf16.xpose.msra.mxu0 0
        %814 = vmatprep.subr.bf16.mxu0 0
        %815 = vmatpush2.bf16.xpose.msra.mxu0 0
        %816 = vmatprep.subr.bf16.mxu0 0
        %817 = vmatpush2.bf16.xpose.msra.mxu0 0
        %818 = vmatprep.subr.bf16.mxu0 0
        %819 = vmatpush2.bf16.xpose.msra.mxu0 0
        %820 = vmatprep.subr.bf16.mxu0 0
        %821 = vmatpush2.bf16.xpose.msra.mxu0 0
        %822 = vmatprep.mubr.bf16.mxu0 0
        %823 = vmatmul.mubr.bf16.gmra.mxu0 %v782
        %v824 = vpop.f32.mrf.mxu0
        %v825 = vadd.f32 %v769, %v824
        %v826 = vpop.f32.mrf.mxu0
        %v827 = vpop.f32.mrf.mxu0
        %v828 = vpop.f32.mrf.mxu0
        %829 = vdwg.mxu0
        %v830 = vld [vmem:[#allocation12] sm:$0xf]
        %v831 = vld [vmem:[#allocation12 + $0x4] sm:$0xf]
        %v832 = vld [vmem:[#allocation12 + $0x8] sm:$0xf]
        %v833 = vld [vmem:[#allocation12 + $0xc] sm:$0xf]
        %s834 = scalar_lea.vmem [#allocation17], %s43
        %v835 = vld [vmem:[%s834] sm:$0x1]
        %v837 = vlaneseq
        %v838 = vshrl.u32 %v837, 7
        %v839 = vsub.s32 0, %v838
        %v840 = vrot.slane %v835, %v839
        %v846 = vunpack.c.l.b16 %v830
        %v847 = vunpack.c.l.b16 %v831
        %v848 = vunpack.c.l.b16 %v832
        %v849 = vunpack.c.l.b16 %v833
        %v850 = vpack.c.b16 %v847, %v846
        %v851 = vpack.c.b16 %v849, %v848
        %v853 = vsel %vm709, %v686, 0
        %v856 = vsel %vm709, %v850, 0
        %v859 = vsel %vm709, %v851, 0
        %861 = vmatprep.subr.bf16.mxu0 0
        %862 = vmatpush1.bf16.xpose.msra.mxu0 0
        %863 = vmatprep.subr.bf16.mxu0 0
        %864 = vmatpush1.bf16.xpose.msra.mxu0 0
        %865 = vmatprep.subr.bf16.mxu0 0
        %866 = vmatpush1.bf16.xpose.msra.mxu0 0
        %867 = vmatprep.subr.bf16.mxu0 0
        %868 = vmatpush1.bf16.xpose.msra.mxu0 0
        %869 = vmatprep.subr.bf16.mxu0 0
        %870 = vmatpush1.bf16.xpose.msra.mxu0 0
        %871 = vmatprep.subr.bf16.mxu0 0
        %872 = vmatpush1.bf16.xpose.msra.mxu0 0
        %873 = vmatprep.subr.bf16.mxu0 0
        %874 = vmatpush1.bf16.xpose.msra.mxu0 %v859
        %875 = vmatprep.subr.bf16.mxu0 0
        %876 = vmatpush1.bf16.xpose.msra.mxu0 %v856
        %877 = vmatprep.subr.bf16.mxu0 0
        %878 = vmatpush2.bf16.xpose.msra.mxu0 0
        %879 = vmatprep.subr.bf16.mxu0 0
        %880 = vmatpush2.bf16.xpose.msra.mxu0 0
        %881 = vmatprep.subr.bf16.mxu0 0
        %882 = vmatpush2.bf16.xpose.msra.mxu0 0
        %883 = vmatprep.subr.bf16.mxu0 0
        %884 = vmatpush2.bf16.xpose.msra.mxu0 0
        %885 = vmatprep.subr.bf16.mxu0 0
        %886 = vmatpush2.bf16.xpose.msra.mxu0 0
        %887 = vmatprep.subr.bf16.mxu0 0
        %888 = vmatpush2.bf16.xpose.msra.mxu0 0
        %889 = vmatprep.subr.bf16.mxu0 0
        %890 = vmatpush2.bf16.xpose.msra.mxu0 0
        %891 = vmatprep.subr.bf16.mxu0 0
        %892 = vmatpush2.bf16.xpose.msra.mxu0 0
        %893 = vmatprep.mubr.bf16.mxu0 0
        %894 = vmatmul.mubr.bf16.gmra.mxu0 %v853
        %v895 = vpop.f32.mrf.mxu0
        %v896 = vadd.f32 %v840, %v895
        %v897 = vpop.f32.mrf.mxu0
        %v898 = vpop.f32.mrf.mxu0
        %v899 = vpop.f32.mrf.mxu0
        %900 = vdwg.mxu0
        %902 = vrot.lane.b32.xlu0 %v754, 120
        %v903 = vpop.permute.xlu0 %902
        %905 = vrot.lane.b32.xlu0 %v754, 112
        %v906 = vpop.permute.xlu0 %905
        %908 = vrot.lane.b32.xlu0 %v754, 104
        %v909 = vpop.permute.xlu0 %908
        %v911 = vcombine.low %v754, %v906
        %v912 = vcombine.high %v754, %v906
        %v914 = vunpack.c.l.s4 1983009808
        %v915 = vunpack.c.0.s8 %v914
        %v916 = vlaneseq
        %v917 = vshrl.u32 %v916, 7
        %v918 = vsub.s32 %v915, %v917
        %v919 = vrot.slane %v911, %v918
        %v921 = vunpack.c.l.s4 1983009808
        %v922 = vunpack.c.0.s8 %v921
        %v923 = vlaneseq
        %v924 = vshrl.u32 %v923, 7
        %v925 = vsub.s32 %v922, %v924
        %v926 = vrot.slane %v912, %v925
        %v927 = vcombine.low %v903, %v909
        %v928 = vcombine.high %v903, %v909
        %v930 = vunpack.c.l.s4 1983009808
        %v931 = vunpack.c.0.s8 %v930
        %v932 = vlaneseq
        %v933 = vshrl.u32 %v932, 7
        %v934 = vsub.s32 %v931, %v933
        %v935 = vrot.slane %v927, %v934
        %v937 = vunpack.c.l.s4 1983009808
        %v938 = vunpack.c.0.s8 %v937
        %v939 = vlaneseq
        %v940 = vshrl.u32 %v939, 7
        %v941 = vsub.s32 %v938, %v940
        %v942 = vrot.slane %v928, %v941
        %v943 = vcombine.low %v919, %v935
        %v944 = vcombine.high %v919, %v935
        %v946 = vunpack.c.l.s4 1934713408
        %v947 = vunpack.c.0.s8 %v946
        %v948 = vlaneseq
        %v949 = vshrl.u32 %v948, 7
        %v950 = vsub.s32 %v947, %v949
        %v951 = vrot.slane %v943, %v950
        %v953 = vunpack.c.l.s4 1934713408
        %v954 = vunpack.c.0.s8 %v953
        %v955 = vlaneseq
        %v956 = vshrl.u32 %v955, 7
        %v957 = vsub.s32 %v954, %v956
        %v958 = vrot.slane %v944, %v957
        %v959 = vcombine.low %v926, %v942
        %v960 = vcombine.high %v926, %v942
        %v962 = vunpack.c.l.s4 1934713408
        %v963 = vunpack.c.0.s8 %v962
        %v964 = vlaneseq
        %v965 = vshrl.u32 %v964, 7
        %v966 = vsub.s32 %v963, %v965
        %v967 = vrot.slane %v959, %v966
        %v969 = vunpack.c.l.s4 1934713408
        %v970 = vunpack.c.0.s8 %v969
        %v971 = vlaneseq
        %v972 = vshrl.u32 %v971, 7
        %v973 = vsub.s32 %v970, %v972
        %v974 = vrot.slane %v960, %v973
        %v975 = vcombine.high %v951, 0.0
        %v976 = vcombine.high %v958, 0.0
        %v977 = vcombine.high %v967, 0.0
        %v978 = vcombine.high %v974, 0.0
        %v979 = vpack.c.bf16 %v951, %v951
        %v980 = vpack.c.bf16 %v975, %v975
        %v981 = vpack.c.bf16 %v958, %v958
        %v982 = vpack.c.bf16 %v976, %v976
        %v983 = vpack.c.bf16 %v967, %v967
        %v984 = vpack.c.bf16 %v977, %v977
        %v985 = vpack.c.bf16 %v974, %v974
        %v986 = vpack.c.bf16 %v978, %v978
        %988 = vrot.lane.b32.xlu0 %v825, 120
        %v989 = vpop.permute.xlu0 %988
        %991 = vrot.lane.b32.xlu0 %v825, 112
        %v992 = vpop.permute.xlu0 %991
        %994 = vrot.lane.b32.xlu0 %v825, 104
        %v995 = vpop.permute.xlu0 %994
        %v997 = vcombine.low %v825, %v992
        %v998 = vcombine.high %v825, %v992
        %v1000 = vunpack.c.l.s4 1983009808
        %v1001 = vunpack.c.0.s8 %v1000
        %v1002 = vlaneseq
        %v1003 = vshrl.u32 %v1002, 7
        %v1004 = vsub.s32 %v1001, %v1003
        %v1005 = vrot.slane %v997, %v1004
        %v1007 = vunpack.c.l.s4 1983009808
        %v1008 = vunpack.c.0.s8 %v1007
        %v1009 = vlaneseq
        %v1010 = vshrl.u32 %v1009, 7
        %v1011 = vsub.s32 %v1008, %v1010
        %v1012 = vrot.slane %v998, %v1011
        %v1013 = vcombine.low %v989, %v995
        %v1014 = vcombine.high %v989, %v995
        %v1016 = vunpack.c.l.s4 1983009808
        %v1017 = vunpack.c.0.s8 %v1016
        %v1018 = vlaneseq
        %v1019 = vshrl.u32 %v1018, 7
        %v1020 = vsub.s32 %v1017, %v1019
        %v1021 = vrot.slane %v1013, %v1020
        %v1023 = vunpack.c.l.s4 1983009808
        %v1024 = vunpack.c.0.s8 %v1023
        %v1025 = vlaneseq
        %v1026 = vshrl.u32 %v1025, 7
        %v1027 = vsub.s32 %v1024, %v1026
        %v1028 = vrot.slane %v1014, %v1027
        %v1029 = vcombine.low %v1005, %v1021
        %v1030 = vcombine.high %v1005, %v1021
        %v1032 = vunpack.c.l.s4 1934713408
        %v1033 = vunpack.c.0.s8 %v1032
        %v1034 = vlaneseq
        %v1035 = vshrl.u32 %v1034, 7
        %v1036 = vsub.s32 %v1033, %v1035
        %v1037 = vrot.slane %v1029, %v1036
        %v1039 = vunpack.c.l.s4 1934713408
        %v1040 = vunpack.c.0.s8 %v1039
        %v1041 = vlaneseq
        %v1042 = vshrl.u32 %v1041, 7
        %v1043 = vsub.s32 %v1040, %v1042
        %v1044 = vrot.slane %v1030, %v1043
        %v1045 = vcombine.low %v1012, %v1028
        %v1046 = vcombine.high %v1012, %v1028
        %v1048 = vunpack.c.l.s4 1934713408
        %v1049 = vunpack.c.0.s8 %v1048
        %v1050 = vlaneseq
        %v1051 = vshrl.u32 %v1050, 7
        %v1052 = vsub.s32 %v1049, %v1051
        %v1053 = vrot.slane %v1045, %v1052
        %v1055 = vunpack.c.l.s4 1934713408
        %v1056 = vunpack.c.0.s8 %v1055
        %v1057 = vlaneseq
        %v1058 = vshrl.u32 %v1057, 7
        %v1059 = vsub.s32 %v1056, %v1058
        %v1060 = vrot.slane %v1046, %v1059
        %v1061 = vcombine.high %v1037, 0.0
        %v1062 = vcombine.high %v1044, 0.0
        %v1063 = vcombine.high %v1053, 0.0
        %v1064 = vcombine.high %v1060, 0.0
        %v1065 = vpack.c.bf16 %v1037, %v1037
        %v1066 = vpack.c.bf16 %v1061, %v1061
        %v1067 = vpack.c.bf16 %v1044, %v1044
        %v1068 = vpack.c.bf16 %v1062, %v1062
        %v1069 = vpack.c.bf16 %v1053, %v1053
        %v1070 = vpack.c.bf16 %v1063, %v1063
        %v1071 = vpack.c.bf16 %v1060, %v1060
        %v1072 = vpack.c.bf16 %v1064, %v1064
        %1074 = vrot.lane.b32.xlu0 %v896, 120
        %v1075 = vpop.permute.xlu0 %1074
        %1077 = vrot.lane.b32.xlu0 %v896, 112
        %v1078 = vpop.permute.xlu0 %1077
        %1080 = vrot.lane.b32.xlu0 %v896, 104
        %v1081 = vpop.permute.xlu0 %1080
        %v1083 = vcombine.low %v896, %v1078
        %v1084 = vcombine.high %v896, %v1078
        %v1086 = vunpack.c.l.s4 1983009808
        %v1087 = vunpack.c.0.s8 %v1086
        %v1088 = vlaneseq
        %v1089 = vshrl.u32 %v1088, 7
        %v1090 = vsub.s32 %v1087, %v1089
        %v1091 = vrot.slane %v1083, %v1090
        %v1093 = vunpack.c.l.s4 1983009808
        %v1094 = vunpack.c.0.s8 %v1093
        %v1095 = vlaneseq
        %v1096 = vshrl.u32 %v1095, 7
        %v1097 = vsub.s32 %v1094, %v1096
        %v1098 = vrot.slane %v1084, %v1097
        %v1099 = vcombine.low %v1075, %v1081
        %v1100 = vcombine.high %v1075, %v1081
        %v1102 = vunpack.c.l.s4 1983009808
        %v1103 = vunpack.c.0.s8 %v1102
        %v1104 = vlaneseq
        %v1105 = vshrl.u32 %v1104, 7
        %v1106 = vsub.s32 %v1103, %v1105
        %v1107 = vrot.slane %v1099, %v1106
        %v1109 = vunpack.c.l.s4 1983009808
        %v1110 = vunpack.c.0.s8 %v1109
        %v1111 = vlaneseq
        %v1112 = vshrl.u32 %v1111, 7
        %v1113 = vsub.s32 %v1110, %v1112
        %v1114 = vrot.slane %v1100, %v1113
        %v1115 = vcombine.low %v1091, %v1107
        %v1116 = vcombine.high %v1091, %v1107
        %v1118 = vunpack.c.l.s4 1934713408
        %v1119 = vunpack.c.0.s8 %v1118
        %v1120 = vlaneseq
        %v1121 = vshrl.u32 %v1120, 7
        %v1122 = vsub.s32 %v1119, %v1121
        %v1123 = vrot.slane %v1115, %v1122
        %v1125 = vunpack.c.l.s4 1934713408
        %v1126 = vunpack.c.0.s8 %v1125
        %v1127 = vlaneseq
        %v1128 = vshrl.u32 %v1127, 7
        %v1129 = vsub.s32 %v1126, %v1128
        %v1130 = vrot.slane %v1116, %v1129
        %v1131 = vcombine.low %v1098, %v1114
        %v1132 = vcombine.high %v1098, %v1114
        %v1134 = vunpack.c.l.s4 1934713408
        %v1135 = vunpack.c.0.s8 %v1134
        %v1136 = vlaneseq
        %v1137 = vshrl.u32 %v1136, 7
        %v1138 = vsub.s32 %v1135, %v1137
        %v1139 = vrot.slane %v1131, %v1138
        %v1141 = vunpack.c.l.s4 1934713408
        %v1142 = vunpack.c.0.s8 %v1141
        %v1143 = vlaneseq
        %v1144 = vshrl.u32 %v1143, 7
        %v1145 = vsub.s32 %v1142, %v1144
        %v1146 = vrot.slane %v1132, %v1145
        %v1147 = vcombine.high %v1123, 0.0
        %v1148 = vcombine.high %v1130, 0.0
        %v1149 = vcombine.high %v1139, 0.0
        %v1150 = vcombine.high %v1146, 0.0
        %v1151 = vpack.c.bf16 %v1123, %v1123
        %v1152 = vpack.c.bf16 %v1147, %v1147
        %v1153 = vpack.c.bf16 %v1130, %v1130
        %v1154 = vpack.c.bf16 %v1148, %v1148
        %v1155 = vpack.c.bf16 %v1139, %v1139
        %v1156 = vpack.c.bf16 %v1149, %v1149
        %v1157 = vpack.c.bf16 %v1146, %v1146
        %v1158 = vpack.c.bf16 %v1150, %v1150
        %v1159 = vcombine.low %v979, %v983
        %v1161 = vunpack.c.l.s4 1983009808
        %v1162 = vunpack.c.0.s8 %v1161
        %v1163 = vlaneseq
        %v1164 = vshrl.u32 %v1163, 7
        %v1165 = vsub.s32 %v1162, %v1164
        %v1166 = vrot.slane %v1159, %v1165
        %v1167 = vcombine.low %v981, %v985
        %v1169 = vunpack.c.l.s4 1983009808
        %v1170 = vunpack.c.0.s8 %v1169
        %v1171 = vlaneseq
        %v1172 = vshrl.u32 %v1171, 7
        %v1173 = vsub.s32 %v1170, %v1172
        %v1174 = vrot.slane %v1167, %v1173
        %v1175 = vcombine.low %v1166, %v1174
        %v1177 = vunpack.c.l.s4 1934713408
        %v1178 = vunpack.c.0.s8 %v1177
        %v1179 = vlaneseq
        %v1180 = vshrl.u32 %v1179, 7
        %v1181 = vsub.s32 %v1178, %v1180
        %v1182 = vrot.slane %v1175, %v1181
        %v1183 = vcombine.high %v1182, 0
        %v1184 = vcombine.low %v980, %v984
        %v1186 = vunpack.c.l.s4 1983009808
        %v1187 = vunpack.c.0.s8 %v1186
        %v1188 = vlaneseq
        %v1189 = vshrl.u32 %v1188, 7
        %v1190 = vsub.s32 %v1187, %v1189
        %v1191 = vrot.slane %v1184, %v1190
        %v1192 = vcombine.low %v982, %v986
        %v1194 = vunpack.c.l.s4 1983009808
        %v1195 = vunpack.c.0.s8 %v1194
        %v1196 = vlaneseq
        %v1197 = vshrl.u32 %v1196, 7
        %v1198 = vsub.s32 %v1195, %v1197
        %v1199 = vrot.slane %v1192, %v1198
        %v1200 = vcombine.low %v1191, %v1199
        %v1202 = vunpack.c.l.s4 1934713408
        %v1203 = vunpack.c.0.s8 %v1202
        %v1204 = vlaneseq
        %v1205 = vshrl.u32 %v1204, 7
        %v1206 = vsub.s32 %v1203, %v1205
        %v1207 = vrot.slane %v1200, %v1206
        %v1208 = vcombine.high %v1207, 0
        %v1211 = vpack.i.b16 %v1207, %v1182
        %v1212 = vshrl.u32 %v1182, 16
        %v1213 = vshrl.u32 %v1207, 16
        %v1214 = vpack.i.b16 %v1213, %v1212
        %v1217 = vpack.i.b16 %v1208, %v1183
        %v1218 = vshrl.u32 %v1183, 16
        %v1219 = vshrl.u32 %v1208, 16
        %v1220 = vpack.i.b16 %v1219, %v1218
        %1221 = vxpose.xlu0.c.b16.start [1/8] %v1065, 128
        %1222 = vxpose.xlu0.c.b16.cont [2/8] 0, 128
        %1223 = vxpose.xlu0.c.b16.cont [3/8] 0, 128
        %1224 = vxpose.xlu0.c.b16.cont [4/8] 0, 128
        %1225 = vxpose.xlu0.c.b16.cont [5/8] 0, 128
        %1226 = vxpose.xlu0.c.b16.cont [6/8] 0, 128
        %1227 = vxpose.xlu0.c.b16.cont [7/8] 0, 128
        %1228 = vxpose.xlu0.c.b16.end [8/8] 0, 128
        %v1229 = vpop.trf.xlu0
        %v1230 = vpop.trf.xlu0
        %v1231 = vpop.trf.xlu0
        %v1232 = vpop.trf.xlu0
        %v1233 = vpop.trf.xlu0
        %v1234 = vpop.trf.xlu0
        %v1235 = vpop.trf.xlu0
        %v1236 = vpop.trf.xlu0
        %1237 = vxpose.xlu0.c.b16.start [1/8] %v1066, 128
        %1238 = vxpose.xlu0.c.b16.cont [2/8] 0, 128
        %1239 = vxpose.xlu0.c.b16.cont [3/8] 0, 128
        %1240 = vxpose.xlu0.c.b16.cont [4/8] 0, 128
        %1241 = vxpose.xlu0.c.b16.cont [5/8] 0, 128
        %1242 = vxpose.xlu0.c.b16.cont [6/8] 0, 128
        %1243 = vxpose.xlu0.c.b16.cont [7/8] 0, 128
        %1244 = vxpose.xlu0.c.b16.end [8/8] 0, 128
        %v1245 = vpop.trf.xlu0
        %v1246 = vpop.trf.xlu0
        %v1247 = vpop.trf.xlu0
        %v1248 = vpop.trf.xlu0
        %v1249 = vpop.trf.xlu0
        %v1250 = vpop.trf.xlu0
        %v1251 = vpop.trf.xlu0
        %v1252 = vpop.trf.xlu0
        %1253 = vxpose.xlu0.c.b16.start [1/8] %v1067, 128
        %1254 = vxpose.xlu0.c.b16.cont [2/8] 0, 128
        %1255 = vxpose.xlu0.c.b16.cont [3/8] 0, 128
        %1256 = vxpose.xlu0.c.b16.cont [4/8] 0, 128
        %1257 = vxpose.xlu0.c.b16.cont [5/8] 0, 128
        %1258 = vxpose.xlu0.c.b16.cont [6/8] 0, 128
        %1259 = vxpose.xlu0.c.b16.cont [7/8] 0, 128
        %1260 = vxpose.xlu0.c.b16.end [8/8] 0, 128
        %v1261 = vpop.trf.xlu0
        %v1262 = vpop.trf.xlu0
        %v1263 = vpop.trf.xlu0
        %v1264 = vpop.trf.xlu0
        %v1265 = vpop.trf.xlu0
        %v1266 = vpop.trf.xlu0
        %v1267 = vpop.trf.xlu0
        %v1268 = vpop.trf.xlu0
        %1269 = vxpose.xlu0.c.b16.start [1/8] %v1068, 128
        %1270 = vxpose.xlu0.c.b16.cont [2/8] 0, 128
        %1271 = vxpose.xlu0.c.b16.cont [3/8] 0, 128
        %1272 = vxpose.xlu0.c.b16.cont [4/8] 0, 128
        %1273 = vxpose.xlu0.c.b16.cont [5/8] 0, 128
        %1274 = vxpose.xlu0.c.b16.cont [6/8] 0, 128
        %1275 = vxpose.xlu0.c.b16.cont [7/8] 0, 128
        %1276 = vxpose.xlu0.c.b16.end [8/8] 0, 128
        %v1277 = vpop.trf.xlu0
        %v1278 = vpop.trf.xlu0
        %v1279 = vpop.trf.xlu0
        %v1280 = vpop.trf.xlu0
        %v1281 = vpop.trf.xlu0
        %v1282 = vpop.trf.xlu0
        %v1283 = vpop.trf.xlu0
        %v1284 = vpop.trf.xlu0
        %1285 = vxpose.xlu0.c.b16.start [1/8] %v1069, 128
        %1286 = vxpose.xlu0.c.b16.cont [2/8] 0, 128
        %1287 = vxpose.xlu0.c.b16.cont [3/8] 0, 128
        %1288 = vxpose.xlu0.c.b16.cont [4/8] 0, 128
        %1289 = vxpose.xlu0.c.b16.cont [5/8] 0, 128
        %1290 = vxpose.xlu0.c.b16.cont [6/8] 0, 128
        %1291 = vxpose.xlu0.c.b16.cont [7/8] 0, 128
        %1292 = vxpose.xlu0.c.b16.end [8/8] 0, 128
        %v1293 = vpop.trf.xlu0
        %v1294 = vpop.trf.xlu0
        %v1295 = vpop.trf.xlu0
        %v1296 = vpop.trf.xlu0
        %v1297 = vpop.trf.xlu0
        %v1298 = vpop.trf.xlu0
        %v1299 = vpop.trf.xlu0
        %v1300 = vpop.trf.xlu0
        %1301 = vxpose.xlu0.c.b16.start [1/8] %v1070, 128
        %1302 = vxpose.xlu0.c.b16.cont [2/8] 0, 128
        %1303 = vxpose.xlu0.c.b16.cont [3/8] 0, 128
        %1304 = vxpose.xlu0.c.b16.cont [4/8] 0, 128
        %1305 = vxpose.xlu0.c.b16.cont [5/8] 0, 128
        %1306 = vxpose.xlu0.c.b16.cont [6/8] 0, 128
        %1307 = vxpose.xlu0.c.b16.cont [7/8] 0, 128
        %1308 = vxpose.xlu0.c.b16.end [8/8] 0, 128
        %v1309 = vpop.trf.xlu0
        %v1310 = vpop.trf.xlu0
        %v1311 = vpop.trf.xlu0
        %v1312 = vpop.trf.xlu0
        %v1313 = vpop.trf.xlu0
        %v1314 = vpop.trf.xlu0
        %v1315 = vpop.trf.xlu0
        %v1316 = vpop.trf.xlu0
        %1317 = vxpose.xlu0.c.b16.start [1/8] %v1071, 128
        %1318 = vxpose.xlu0.c.b16.cont [2/8] 0, 128
        %1319 = vxpose.xlu0.c.b16.cont [3/8] 0, 128
        %1320 = vxpose.xlu0.c.b16.cont [4/8] 0, 128
        %1321 = vxpose.xlu0.c.b16.cont [5/8] 0, 128
        %1322 = vxpose.xlu0.c.b16.cont [6/8] 0, 128
        %1323 = vxpose.xlu0.c.b16.cont [7/8] 0, 128
        %1324 = vxpose.xlu0.c.b16.end [8/8] 0, 128
        %v1325 = vpop.trf.xlu0
        %v1326 = vpop.trf.xlu0
        %v1327 = vpop.trf.xlu0
        %v1328 = vpop.trf.xlu0
        %v1329 = vpop.trf.xlu0
        %v1330 = vpop.trf.xlu0
        %v1331 = vpop.trf.xlu0
        %v1332 = vpop.trf.xlu0
        %1333 = vxpose.xlu0.c.b16.start [1/8] %v1072, 128
        %1334 = vxpose.xlu0.c.b16.cont [2/8] 0, 128
        %1335 = vxpose.xlu0.c.b16.cont [3/8] 0, 128
        %1336 = vxpose.xlu0.c.b16.cont [4/8] 0, 128
        %1337 = vxpose.xlu0.c.b16.cont [5/8] 0, 128
        %1338 = vxpose.xlu0.c.b16.cont [6/8] 0, 128
        %1339 = vxpose.xlu0.c.b16.cont [7/8] 0, 128
        %1340 = vxpose.xlu0.c.b16.end [8/8] 0, 128
        %v1341 = vpop.trf.xlu0
        %v1342 = vpop.trf.xlu0
        %v1343 = vpop.trf.xlu0
        %v1344 = vpop.trf.xlu0
        %v1345 = vpop.trf.xlu0
        %v1346 = vpop.trf.xlu0
        %v1347 = vpop.trf.xlu0
        %v1348 = vpop.trf.xlu0
        %v1349 = vcombine.low %v1229, %v1293
        %v1351 = vunpack.c.l.s4 1983009808
        %v1352 = vunpack.c.0.s8 %v1351
        %v1353 = vlaneseq
        %v1354 = vshrl.u32 %v1353, 7
        %v1355 = vsub.s32 %v1352, %v1354
        %v1356 = vrot.slane %v1349, %v1355
        %v1357 = vcombine.low %v1261, %v1325
        %v1359 = vunpack.c.l.s4 1983009808
        %v1360 = vunpack.c.0.s8 %v1359
        %v1361 = vlaneseq
        %v1362 = vshrl.u32 %v1361, 7
        %v1363 = vsub.s32 %v1360, %v1362
        %v1364 = vrot.slane %v1357, %v1363
        %v1365 = vcombine.low %v1356, %v1364
        %v1366 = vcombine.high %v1356, %v1364
        %v1368 = vunpack.c.l.s4 1934713408
        %v1369 = vunpack.c.0.s8 %v1368
        %v1370 = vlaneseq
        %v1371 = vshrl.u32 %v1370, 7
        %v1372 = vsub.s32 %v1369, %v1371
        %v1373 = vrot.slane %v1365, %v1372
        %v1375 = vunpack.c.l.s4 1934713408
        %v1376 = vunpack.c.0.s8 %v1375
        %v1377 = vlaneseq
        %v1378 = vshrl.u32 %v1377, 7
        %v1379 = vsub.s32 %v1376, %v1378
        %v1380 = vrot.slane %v1366, %v1379
        %v1381 = vcombine.high %v1373, 0
        %v1382 = vcombine.high %v1380, 0
        %v1383 = vcombine.low %v1245, %v1309
        %v1385 = vunpack.c.l.s4 1983009808
        %v1386 = vunpack.c.0.s8 %v1385
        %v1387 = vlaneseq
        %v1388 = vshrl.u32 %v1387, 7
        %v1389 = vsub.s32 %v1386, %v1388
        %v1390 = vrot.slane %v1383, %v1389
        %v1391 = vcombine.low %v1277, %v1341
        %v1393 = vunpack.c.l.s4 1983009808
        %v1394 = vunpack.c.0.s8 %v1393
        %v1395 = vlaneseq
        %v1396 = vshrl.u32 %v1395, 7
        %v1397 = vsub.s32 %v1394, %v1396
        %v1398 = vrot.slane %v1391, %v1397
        %v1399 = vcombine.low %v1390, %v1398
        %v1400 = vcombine.high %v1390, %v1398
        %v1402 = vunpack.c.l.s4 1934713408
        %v1403 = vunpack.c.0.s8 %v1402
        %v1404 = vlaneseq
        %v1405 = vshrl.u32 %v1404, 7
        %v1406 = vsub.s32 %v1403, %v1405
        %v1407 = vrot.slane %v1399, %v1406
        %v1409 = vunpack.c.l.s4 1934713408
        %v1410 = vunpack.c.0.s8 %v1409
        %v1411 = vlaneseq
        %v1412 = vshrl.u32 %v1411, 7
        %v1413 = vsub.s32 %v1410, %v1412
        %v1414 = vrot.slane %v1400, %v1413
        %v1415 = vcombine.high %v1407, 0
        %v1416 = vcombine.high %v1414, 0
        %v1419 = vpack.i.b16 %v1407, %v1373
        %v1421 = vshrl.u32 %v1373, 16
        %v1422 = vshrl.u32 %v1407, 16
        %v1423 = vpack.i.b16 %v1422, %v1421
        %v1427 = vpack.i.b16 %v1415, %v1381
        %v1429 = vshrl.u32 %v1381, 16
        %v1430 = vshrl.u32 %v1415, 16
        %v1431 = vpack.i.b16 %v1430, %v1429
        %v1435 = vpack.i.b16 %v1414, %v1380
        %v1437 = vshrl.u32 %v1380, 16
        %v1438 = vshrl.u32 %v1414, 16
        %v1439 = vpack.i.b16 %v1438, %v1437
        %v1443 = vpack.i.b16 %v1416, %v1382
        %v1445 = vshrl.u32 %v1382, 16
        %v1446 = vshrl.u32 %v1416, 16
        %v1447 = vpack.i.b16 %v1446, %v1445
        %1449 = vxpose.xlu0.c.b16.start [1/8] %v1419, 128
        %1450 = vxpose.xlu0.c.b16.cont [2/8] 0, 128
        %1451 = vxpose.xlu0.c.b16.cont [3/8] 0, 128
        %1452 = vxpose.xlu0.c.b16.cont [4/8] 0, 128
        %1453 = vxpose.xlu0.c.b16.cont [5/8] 0, 128
        %1454 = vxpose.xlu0.c.b16.cont [6/8] 0, 128
        %1455 = vxpose.xlu0.c.b16.cont [7/8] 0, 128
        %1456 = vxpose.xlu0.c.b16.end [8/8] 0, 128
        %v1457 = vpop.trf.xlu0
        %v1458 = vpop.trf.xlu0
        %v1459 = vpop.trf.xlu0
        %v1460 = vpop.trf.xlu0
        %v1461 = vpop.trf.xlu0
        %v1462 = vpop.trf.xlu0
        %v1463 = vpop.trf.xlu0
        %v1464 = vpop.trf.xlu0
        %1465 = vxpose.xlu0.c.b16.start [1/8] %v1423, 128
        %1466 = vxpose.xlu0.c.b16.cont [2/8] 0, 128
        %1467 = vxpose.xlu0.c.b16.cont [3/8] 0, 128
        %1468 = vxpose.xlu0.c.b16.cont [4/8] 0, 128
        %1469 = vxpose.xlu0.c.b16.cont [5/8] 0, 128
        %1470 = vxpose.xlu0.c.b16.cont [6/8] 0, 128
        %1471 = vxpose.xlu0.c.b16.cont [7/8] 0, 128
        %1472 = vxpose.xlu0.c.b16.end [8/8] 0, 128
        %v1473 = vpop.trf.xlu0
        %v1474 = vpop.trf.xlu0
        %v1475 = vpop.trf.xlu0
        %v1476 = vpop.trf.xlu0
        %v1477 = vpop.trf.xlu0
        %v1478 = vpop.trf.xlu0
        %v1479 = vpop.trf.xlu0
        %v1480 = vpop.trf.xlu0
        %1481 = vxpose.xlu0.c.b16.start [1/8] %v1427, 128
        %1482 = vxpose.xlu0.c.b16.cont [2/8] 0, 128
        %1483 = vxpose.xlu0.c.b16.cont [3/8] 0, 128
        %1484 = vxpose.xlu0.c.b16.cont [4/8] 0, 128
        %1485 = vxpose.xlu0.c.b16.cont [5/8] 0, 128
        %1486 = vxpose.xlu0.c.b16.cont [6/8] 0, 128
        %1487 = vxpose.xlu0.c.b16.cont [7/8] 0, 128
        %1488 = vxpose.xlu0.c.b16.end [8/8] 0, 128
        %v1489 = vpop.trf.xlu0
        %v1490 = vpop.trf.xlu0
        %v1491 = vpop.trf.xlu0
        %v1492 = vpop.trf.xlu0
        %v1493 = vpop.trf.xlu0
        %v1494 = vpop.trf.xlu0
        %v1495 = vpop.trf.xlu0
        %v1496 = vpop.trf.xlu0
        %1497 = vxpose.xlu0.c.b16.start [1/8] %v1431, 128
        %1498 = vxpose.xlu0.c.b16.cont [2/8] 0, 128
        %1499 = vxpose.xlu0.c.b16.cont [3/8] 0, 128
        %1500 = vxpose.xlu0.c.b16.cont [4/8] 0, 128
        %1501 = vxpose.xlu0.c.b16.cont [5/8] 0, 128
        %1502 = vxpose.xlu0.c.b16.cont [6/8] 0, 128
        %1503 = vxpose.xlu0.c.b16.cont [7/8] 0, 128
        %1504 = vxpose.xlu0.c.b16.end [8/8] 0, 128
        %v1505 = vpop.trf.xlu0
        %v1506 = vpop.trf.xlu0
        %v1507 = vpop.trf.xlu0
        %v1508 = vpop.trf.xlu0
        %v1509 = vpop.trf.xlu0
        %v1510 = vpop.trf.xlu0
        %v1511 = vpop.trf.xlu0
        %v1512 = vpop.trf.xlu0
        %1513 = vxpose.xlu0.c.b16.start [1/8] %v1435, 128
        %1514 = vxpose.xlu0.c.b16.cont [2/8] 0, 128
        %1515 = vxpose.xlu0.c.b16.cont [3/8] 0, 128
        %1516 = vxpose.xlu0.c.b16.cont [4/8] 0, 128
        %1517 = vxpose.xlu0.c.b16.cont [5/8] 0, 128
        %1518 = vxpose.xlu0.c.b16.cont [6/8] 0, 128
        %1519 = vxpose.xlu0.c.b16.cont [7/8] 0, 128
        %1520 = vxpose.xlu0.c.b16.end [8/8] 0, 128
        %v1521 = vpop.trf.xlu0
        %v1522 = vpop.trf.xlu0
        %v1523 = vpop.trf.xlu0
        %v1524 = vpop.trf.xlu0
        %v1525 = vpop.trf.xlu0
        %v1526 = vpop.trf.xlu0
        %v1527 = vpop.trf.xlu0
        %v1528 = vpop.trf.xlu0
        %1529 = vxpose.xlu0.c.b16.start [1/8] %v1439, 128
        %1530 = vxpose.xlu0.c.b16.cont [2/8] 0, 128
        %1531 = vxpose.xlu0.c.b16.cont [3/8] 0, 128
        %1532 = vxpose.xlu0.c.b16.cont [4/8] 0, 128
        %1533 = vxpose.xlu0.c.b16.cont [5/8] 0, 128
        %1534 = vxpose.xlu0.c.b16.cont [6/8] 0, 128
        %1535 = vxpose.xlu0.c.b16.cont [7/8] 0, 128
        %1536 = vxpose.xlu0.c.b16.end [8/8] 0, 128
        %v1537 = vpop.trf.xlu0
        %v1538 = vpop.trf.xlu0
        %v1539 = vpop.trf.xlu0
        %v1540 = vpop.trf.xlu0
        %v1541 = vpop.trf.xlu0
        %v1542 = vpop.trf.xlu0
        %v1543 = vpop.trf.xlu0
        %v1544 = vpop.trf.xlu0
        %1545 = vxpose.xlu0.c.b16.start [1/8] %v1443, 128
        %1546 = vxpose.xlu0.c.b16.cont [2/8] 0, 128
        %1547 = vxpose.xlu0.c.b16.cont [3/8] 0, 128
        %1548 = vxpose.xlu0.c.b16.cont [4/8] 0, 128
        %1549 = vxpose.xlu0.c.b16.cont [5/8] 0, 128
        %1550 = vxpose.xlu0.c.b16.cont [6/8] 0, 128
        %1551 = vxpose.xlu0.c.b16.cont [7/8] 0, 128
        %1552 = vxpose.xlu0.c.b16.end [8/8] 0, 128
        %v1553 = vpop.trf.xlu0
        %v1554 = vpop.trf.xlu0
        %v1555 = vpop.trf.xlu0
        %v1556 = vpop.trf.xlu0
        %v1557 = vpop.trf.xlu0
        %v1558 = vpop.trf.xlu0
        %v1559 = vpop.trf.xlu0
        %v1560 = vpop.trf.xlu0
        %1561 = vxpose.xlu0.c.b16.start [1/8] %v1447, 128
        %1562 = vxpose.xlu0.c.b16.cont [2/8] 0, 128
        %1563 = vxpose.xlu0.c.b16.cont [3/8] 0, 128
        %1564 = vxpose.xlu0.c.b16.cont [4/8] 0, 128
        %1565 = vxpose.xlu0.c.b16.cont [5/8] 0, 128
        %1566 = vxpose.xlu0.c.b16.cont [6/8] 0, 128
        %1567 = vxpose.xlu0.c.b16.cont [7/8] 0, 128
        %1568 = vxpose.xlu0.c.b16.end [8/8] 0, 128
        %v1569 = vpop.trf.xlu0
        %v1570 = vpop.trf.xlu0
        %v1571 = vpop.trf.xlu0
        %v1572 = vpop.trf.xlu0
        %v1573 = vpop.trf.xlu0
        %v1574 = vpop.trf.xlu0
        %v1575 = vpop.trf.xlu0
        %v1576 = vpop.trf.xlu0
        %v1577 = vcombine.low %v1457, %v1521
        %v1579 = vunpack.c.l.s4 1983009808
        %v1580 = vunpack.c.0.s8 %v1579
        %v1581 = vlaneseq
        %v1582 = vshrl.u32 %v1581, 7
        %v1583 = vsub.s32 %v1580, %v1582
        %v1584 = vrot.slane %v1577, %v1583
        %v1585 = vcombine.low %v1489, %v1553
        %v1587 = vunpack.c.l.s4 1983009808
        %v1588 = vunpack.c.0.s8 %v1587
        %v1589 = vlaneseq
        %v1590 = vshrl.u32 %v1589, 7
        %v1591 = vsub.s32 %v1588, %v1590
        %v1592 = vrot.slane %v1585, %v1591
        %v1593 = vcombine.low %v1584, %v1592
        %v1595 = vunpack.c.l.s4 1934713408
        %v1596 = vunpack.c.0.s8 %v1595
        %v1597 = vlaneseq
        %v1598 = vshrl.u32 %v1597, 7
        %v1599 = vsub.s32 %v1596, %v1598
        %v1600 = vrot.slane %v1593, %v1599
        %v1601 = vcombine.high %v1600, 0
        %v1602 = vcombine.low %v1473, %v1537
        %v1604 = vunpack.c.l.s4 1983009808
        %v1605 = vunpack.c.0.s8 %v1604
        %v1606 = vlaneseq
        %v1607 = vshrl.u32 %v1606, 7
        %v1608 = vsub.s32 %v1605, %v1607
        %v1609 = vrot.slane %v1602, %v1608
        %v1610 = vcombine.low %v1505, %v1569
        %v1612 = vunpack.c.l.s4 1983009808
        %v1613 = vunpack.c.0.s8 %v1612
        %v1614 = vlaneseq
        %v1615 = vshrl.u32 %v1614, 7
        %v1616 = vsub.s32 %v1613, %v1615
        %v1617 = vrot.slane %v1610, %v1616
        %v1618 = vcombine.low %v1609, %v1617
        %v1620 = vunpack.c.l.s4 1934713408
        %v1621 = vunpack.c.0.s8 %v1620
        %v1622 = vlaneseq
        %v1623 = vshrl.u32 %v1622, 7
        %v1624 = vsub.s32 %v1621, %v1623
        %v1625 = vrot.slane %v1618, %v1624
        %v1626 = vcombine.high %v1625, 0
        %v1629 = vpack.i.b16 %v1625, %v1600
        %v1630 = vshrl.u32 %v1600, 16
        %v1631 = vshrl.u32 %v1625, 16
        %v1632 = vpack.i.b16 %v1631, %v1630
        %v1635 = vpack.i.b16 %v1626, %v1601
        %v1636 = vshrl.u32 %v1601, 16
        %v1637 = vshrl.u32 %v1626, 16
        %v1638 = vpack.i.b16 %v1637, %v1636
        %vm1639 = vcmask 64512
        %v1641 = vsel %vm1639, %v1211, 0
        %vm1643 = vcmask 1043456
        %v1645 = vsel %vm1643, %v1629, 0
        %1647 = vmatprep.subr.bf16.mxu0 0
        %1648 = vmatpush1.bf16.msra.mxu0 0
        %1649 = vmatprep.subr.bf16.mxu0 0
        %1650 = vmatpush1.bf16.msra.mxu0 0
        %1651 = vmatprep.subr.bf16.mxu0 0
        %1652 = vmatpush1.bf16.msra.mxu0 0
        %1653 = vmatprep.subr.bf16.mxu0 0
        %1654 = vmatpush1.bf16.msra.mxu0 0
        %1655 = vmatprep.subr.bf16.mxu0 0
        %1656 = vmatpush1.bf16.msra.mxu0 0
        %1657 = vmatprep.subr.bf16.mxu0 0
        %1658 = vmatpush1.bf16.msra.mxu0 0
        %1659 = vmatprep.subr.bf16.mxu0 0
        %1660 = vmatpush1.bf16.msra.mxu0 0
        %1661 = vmatprep.subr.bf16.mxu0 0
        %1662 = vmatpush1.bf16.msra.mxu0 %v1645
        %1663 = vmatprep.subr.bf16.mxu0 0
        %1664 = vmatpush2.bf16.msra.mxu0 0
        %1665 = vmatprep.subr.bf16.mxu0 0
        %1666 = vmatpush2.bf16.msra.mxu0 0
        %1667 = vmatprep.subr.bf16.mxu0 0
        %1668 = vmatpush2.bf16.msra.mxu0 0
        %1669 = vmatprep.subr.bf16.mxu0 0
        %1670 = vmatpush2.bf16.msra.mxu0 0
        %1671 = vmatprep.subr.bf16.mxu0 0
        %1672 = vmatpush2.bf16.msra.mxu0 0
        %1673 = vmatprep.subr.bf16.mxu0 0
        %1674 = vmatpush2.bf16.msra.mxu0 0
        %1675 = vmatprep.subr.bf16.mxu0 0
        %1676 = vmatpush2.bf16.msra.mxu0 0
        %1677 = vmatprep.subr.bf16.mxu0 0
        %1678 = vmatpush2.bf16.msra.mxu0 0
        %1679 = vmatprep.mubr.bf16.mxu0 0
        %1680 = vmatmul.mubr.bf16.gmra.mxu0 %v1641
        %v1681 = vpop.f32.mrf.mxu0
        %v1682 = vadd.f32 0.0, %v1681
        %v1683 = vpop.f32.mrf.mxu0
        %v1684 = vpop.f32.mrf.mxu0
        %v1685 = vpop.f32.mrf.mxu0
        %1686 = vdwg.mxu0
        %v1688 = vsel %vm1639, %v1214, 0
        %v1691 = vsel %vm1643, %v1632, 0
        %1693 = vmatprep.subr.bf16.mxu0 0
        %1694 = vmatpush1.bf16.msra.mxu0 0
        %1695 = vmatprep.subr.bf16.mxu0 0
        %1696 = vmatpush1.bf16.msra.mxu0 0
        %1697 = vmatprep.subr.bf16.mxu0 0
        %1698 = vmatpush1.bf16.msra.mxu0 0
        %1699 = vmatprep.subr.bf16.mxu0 0
        %1700 = vmatpush1.bf16.msra.mxu0 0
        %1701 = vmatprep.subr.bf16.mxu0 0
        %1702 = vmatpush1.bf16.msra.mxu0 0
        %1703 = vmatprep.subr.bf16.mxu0 0
        %1704 = vmatpush1.bf16.msra.mxu0 0
        %1705 = vmatprep.subr.bf16.mxu0 0
        %1706 = vmatpush1.bf16.msra.mxu0 0
        %1707 = vmatprep.subr.bf16.mxu0 0
        %1708 = vmatpush1.bf16.msra.mxu0 %v1691
        %1709 = vmatprep.subr.bf16.mxu0 0
        %1710 = vmatpush2.bf16.msra.mxu0 0
        %1711 = vmatprep.subr.bf16.mxu0 0
        %1712 = vmatpush2.bf16.msra.mxu0 0
        %1713 = vmatprep.subr.bf16.mxu0 0
        %1714 = vmatpush2.bf16.msra.mxu0 0
        %1715 = vmatprep.subr.bf16.mxu0 0
        %1716 = vmatpush2.bf16.msra.mxu0 0
        %1717 = vmatprep.subr.bf16.mxu0 0
        %1718 = vmatpush2.bf16.msra.mxu0 0
        %1719 = vmatprep.subr.bf16.mxu0 0
        %1720 = vmatpush2.bf16.msra.mxu0 0
        %1721 = vmatprep.subr.bf16.mxu0 0
        %1722 = vmatpush2.bf16.msra.mxu0 0
        %1723 = vmatprep.subr.bf16.mxu0 0
        %1724 = vmatpush2.bf16.msra.mxu0 0
        %1725 = vmatprep.mubr.bf16.mxu0 0
        %1726 = vmatmul.mubr.bf16.gmra.mxu0 %v1688
        %v1727 = vpop.f32.mrf.mxu0
        %v1728 = vadd.f32 0.0, %v1727
        %v1729 = vpop.f32.mrf.mxu0
        %v1730 = vpop.f32.mrf.mxu0
        %v1731 = vpop.f32.mrf.mxu0
        %1732 = vdwg.mxu0
        %v1734 = vsel %vm1639, %v1217, 0
        %v1737 = vsel %vm1643, %v1635, 0
        %1739 = vmatprep.subr.bf16.mxu0 0
        %1740 = vmatpush1.bf16.msra.mxu0 0
        %1741 = vmatprep.subr.bf16.mxu0 0
        %1742 = vmatpush1.bf16.msra.mxu0 0
        %1743 = vmatprep.subr.bf16.mxu0 0
        %1744 = vmatpush1.bf16.msra.mxu0 0
        %1745 = vmatprep.subr.bf16.mxu0 0
        %1746 = vmatpush1.bf16.msra.mxu0 0
        %1747 = vmatprep.subr.bf16.mxu0 0
        %1748 = vmatpush1.bf16.msra.mxu0 0
        %1749 = vmatprep.subr.bf16.mxu0 0
        %1750 = vmatpush1.bf16.msra.mxu0 0
        %1751 = vmatprep.subr.bf16.mxu0 0
        %1752 = vmatpush1.bf16.msra.mxu0 0
        %1753 = vmatprep.subr.bf16.mxu0 0
        %1754 = vmatpush1.bf16.msra.mxu0 %v1737
        %1755 = vmatprep.subr.bf16.mxu0 0
        %1756 = vmatpush2.bf16.msra.mxu0 0
        %1757 = vmatprep.subr.bf16.mxu0 0
        %1758 = vmatpush2.bf16.msra.mxu0 0
        %1759 = vmatprep.subr.bf16.mxu0 0
        %1760 = vmatpush2.bf16.msra.mxu0 0
        %1761 = vmatprep.subr.bf16.mxu0 0
        %1762 = vmatpush2.bf16.msra.mxu0 0
        %1763 = vmatprep.subr.bf16.mxu0 0
        %1764 = vmatpush2.bf16.msra.mxu0 0
        %1765 = vmatprep.subr.bf16.mxu0 0
        %1766 = vmatpush2.bf16.msra.mxu0 0
        %1767 = vmatprep.subr.bf16.mxu0 0
        %1768 = vmatpush2.bf16.msra.mxu0 0
        %1769 = vmatprep.subr.bf16.mxu0 0
        %1770 = vmatpush2.bf16.msra.mxu0 0
        %1771 = vmatprep.mubr.bf16.mxu0 0
        %1772 = vmatmul.mubr.bf16.gmra.mxu0 %v1734
        %v1773 = vpop.f32.mrf.mxu0
        %v1774 = vadd.f32 0.0, %v1773
        %v1775 = vpop.f32.mrf.mxu0
        %v1776 = vpop.f32.mrf.mxu0
        %v1777 = vpop.f32.mrf.mxu0
        %1778 = vdwg.mxu0
        %v1780 = vsel %vm1639, %v1220, 0
        %v1783 = vsel %vm1643, %v1638, 0
        %1785 = vmatprep.subr.bf16.mxu0 0
        %1786 = vmatpush1.bf16.msra.mxu0 0
        %1787 = vmatprep.subr.bf16.mxu0 0
        %1788 = vmatpush1.bf16.msra.mxu0 0
        %1789 = vmatprep.subr.bf16.mxu0 0
        %1790 = vmatpush1.bf16.msra.mxu0 0
        %1791 = vmatprep.subr.bf16.mxu0 0
        %1792 = vmatpush1.bf16.msra.mxu0 0
        %1793 = vmatprep.subr.bf16.mxu0 0
        %1794 = vmatpush1.bf16.msra.mxu0 0
        %1795 = vmatprep.subr.bf16.mxu0 0
        %1796 = vmatpush1.bf16.msra.mxu0 0
        %1797 = vmatprep.subr.bf16.mxu0 0
        %1798 = vmatpush1.bf16.msra.mxu0 0
        %1799 = vmatprep.subr.bf16.mxu0 0
        %1800 = vmatpush1.bf16.msra.mxu0 %v1783
        %1801 = vmatprep.subr.bf16.mxu0 0
        %1802 = vmatpush2.bf16.msra.mxu0 0
        %1803 = vmatprep.subr.bf16.mxu0 0
        %1804 = vmatpush2.bf16.msra.mxu0 0
        %1805 = vmatprep.subr.bf16.mxu0 0
        %1806 = vmatpush2.bf16.msra.mxu0 0
        %1807 = vmatprep.subr.bf16.mxu0 0
        %1808 = vmatpush2.bf16.msra.mxu0 0
        %1809 = vmatprep.subr.bf16.mxu0 0
        %1810 = vmatpush2.bf16.msra.mxu0 0
        %1811 = vmatprep.subr.bf16.mxu0 0
        %1812 = vmatpush2.bf16.msra.mxu0 0
        %1813 = vmatprep.subr.bf16.mxu0 0
        %1814 = vmatpush2.bf16.msra.mxu0 0
        %1815 = vmatprep.subr.bf16.mxu0 0
        %1816 = vmatpush2.bf16.msra.mxu0 0
        %1817 = vmatprep.mubr.bf16.mxu0 0
        %1818 = vmatmul.mubr.bf16.gmra.mxu0 %v1780
        %v1819 = vpop.f32.mrf.mxu0
        %v1820 = vadd.f32 0.0, %v1819
        %v1821 = vpop.f32.mrf.mxu0
        %v1822 = vpop.f32.mrf.mxu0
        %v1823 = vpop.f32.mrf.mxu0
        %1824 = vdwg.mxu0
        %v1825 = vsel %vm1639, %v1682, -inf
        %1826 = vmax.xlane.f32.xlu0 %v1825
        %v1827 = vpop.xlane.xlu0 %1826
        %v1828 = vsel %vm1639, %v1728, -inf
        %1829 = vmax.xlane.f32.xlu0 %v1828
        %v1830 = vpop.xlane.xlu0 %1829
        %v1831 = vsel %vm1639, %v1774, -inf
        %1832 = vmax.xlane.f32.xlu0 %v1831
        %v1833 = vpop.xlane.xlu0 %1832
        %v1834 = vsel %vm1639, %v1820, -inf
        %1835 = vmax.xlane.f32.xlu0 %v1834
        %v1836 = vpop.xlane.xlu0 %1835
        %v1837 = vsub.f32 %v1682, %v1827
        %v1838 = vsub.f32 %v1728, %v1830
        %v1839 = vsub.f32 %v1774, %v1833
        %v1840 = vsub.f32 %v1820, %v1836
        %v1841 = vmul.f32 %v1837, 1.442695
        %v1842 = vpow.pop %v1841
        %v1843 = vmul.f32 %v1838, 1.442695
        %v1844 = vpow.pop %v1843
        %v1845 = vmul.f32 %v1839, 1.442695
        %v1846 = vpow.pop %v1845
        %v1847 = vmul.f32 %v1840, 1.442695
        %v1848 = vpow.pop %v1847
        %v1849 = vsel %vm1639, %v1842, 0.0
        %1850 = vadd.xlane.f32.xlu0 %v1849
        %v1851 = vpop.xlane.xlu0 %1850
        %v1852 = vsel %vm1639, %v1844, 0.0
        %1853 = vadd.xlane.f32.xlu0 %v1852
        %v1854 = vpop.xlane.xlu0 %1853
        %v1855 = vsel %vm1639, %v1846, 0.0
        %1856 = vadd.xlane.f32.xlu0 %v1855
        %v1857 = vpop.xlane.xlu0 %1856
        %v1858 = vsel %vm1639, %v1848, 0.0
        %1859 = vadd.xlane.f32.xlu0 %v1858
        %v1860 = vpop.xlane.xlu0 %1859
        %v1861 = vrcp.pop %v1851
        %v1862 = vrcp.pop %v1854
        %v1863 = vrcp.pop %v1857
        %v1864 = vrcp.pop %v1860
        %v1865 = vmul.f32 %v1842, %v1861
        %v1866 = vmul.f32 %v1844, %v1862
        %v1867 = vmul.f32 %v1846, %v1863
        %v1868 = vmul.f32 %v1848, %v1864
        %v1869 = vpack.c.bf16 %v1865, %v1865
        %v1870 = vpack.c.bf16 %v1866, %v1866
        %v1871 = vpack.c.bf16 %v1867, %v1867
        %v1872 = vpack.c.bf16 %v1868, %v1868
        %1873 = vxpose.xlu0.c.b16.start [1/8] %v1151, 128
        %1874 = vxpose.xlu0.c.b16.cont [2/8] 0, 128
        %1875 = vxpose.xlu0.c.b16.cont [3/8] 0, 128
        %1876 = vxpose.xlu0.c.b16.cont [4/8] 0, 128
        %1877 = vxpose.xlu0.c.b16.cont [5/8] 0, 128
        %1878 = vxpose.xlu0.c.b16.cont [6/8] 0, 128
        %1879 = vxpose.xlu0.c.b16.cont [7/8] 0, 128
        %1880 = vxpose.xlu0.c.b16.end [8/8] 0, 128
        %v1881 = vpop.trf.xlu0
        %v1882 = vpop.trf.xlu0
        %v1883 = vpop.trf.xlu0
        %v1884 = vpop.trf.xlu0
        %v1885 = vpop.trf.xlu0
        %v1886 = vpop.trf.xlu0
        %v1887 = vpop.trf.xlu0
        %v1888 = vpop.trf.xlu0
        %1889 = vxpose.xlu0.c.b16.start [1/8] %v1152, 128
        %1890 = vxpose.xlu0.c.b16.cont [2/8] 0, 128
        %1891 = vxpose.xlu0.c.b16.cont [3/8] 0, 128
        %1892 = vxpose.xlu0.c.b16.cont [4/8] 0, 128
        %1893 = vxpose.xlu0.c.b16.cont [5/8] 0, 128
        %1894 = vxpose.xlu0.c.b16.cont [6/8] 0, 128
        %1895 = vxpose.xlu0.c.b16.cont [7/8] 0, 128
        %1896 = vxpose.xlu0.c.b16.end [8/8] 0, 128
        %v1897 = vpop.trf.xlu0
        %v1898 = vpop.trf.xlu0
        %v1899 = vpop.trf.xlu0
        %v1900 = vpop.trf.xlu0
        %v1901 = vpop.trf.xlu0
        %v1902 = vpop.trf.xlu0
        %v1903 = vpop.trf.xlu0
        %v1904 = vpop.trf.xlu0
        %1905 = vxpose.xlu0.c.b16.start [1/8] %v1153, 128
        %1906 = vxpose.xlu0.c.b16.cont [2/8] 0, 128
        %1907 = vxpose.xlu0.c.b16.cont [3/8] 0, 128
        %1908 = vxpose.xlu0.c.b16.cont [4/8] 0, 128
        %1909 = vxpose.xlu0.c.b16.cont [5/8] 0, 128
        %1910 = vxpose.xlu0.c.b16.cont [6/8] 0, 128
        %1911 = vxpose.xlu0.c.b16.cont [7/8] 0, 128
        %1912 = vxpose.xlu0.c.b16.end [8/8] 0, 128
        %v1913 = vpop.trf.xlu0
        %v1914 = vpop.trf.xlu0
        %v1915 = vpop.trf.xlu0
        %v1916 = vpop.trf.xlu0
        %v1917 = vpop.trf.xlu0
        %v1918 = vpop.trf.xlu0
        %v1919 = vpop.trf.xlu0
        %v1920 = vpop.trf.xlu0
        %1921 = vxpose.xlu0.c.b16.start [1/8] %v1154, 128
        %1922 = vxpose.xlu0.c.b16.cont [2/8] 0, 128
        %1923 = vxpose.xlu0.c.b16.cont [3/8] 0, 128
        %1924 = vxpose.xlu0.c.b16.cont [4/8] 0, 128
        %1925 = vxpose.xlu0.c.b16.cont [5/8] 0, 128
        %1926 = vxpose.xlu0.c.b16.cont [6/8] 0, 128
        %1927 = vxpose.xlu0.c.b16.cont [7/8] 0, 128
        %1928 = vxpose.xlu0.c.b16.end [8/8] 0, 128
        %v1929 = vpop.trf.xlu0
        %v1930 = vpop.trf.xlu0
        %v1931 = vpop.trf.xlu0
        %v1932 = vpop.trf.xlu0
        %v1933 = vpop.trf.xlu0
        %v1934 = vpop.trf.xlu0
        %v1935 = vpop.trf.xlu0
        %v1936 = vpop.trf.xlu0
        %1937 = vxpose.xlu0.c.b16.start [1/8] %v1155, 128
        %1938 = vxpose.xlu0.c.b16.cont [2/8] 0, 128
        %1939 = vxpose.xlu0.c.b16.cont [3/8] 0, 128
        %1940 = vxpose.xlu0.c.b16.cont [4/8] 0, 128
        %1941 = vxpose.xlu0.c.b16.cont [5/8] 0, 128
        %1942 = vxpose.xlu0.c.b16.cont [6/8] 0, 128
        %1943 = vxpose.xlu0.c.b16.cont [7/8] 0, 128
        %1944 = vxpose.xlu0.c.b16.end [8/8] 0, 128
        %v1945 = vpop.trf.xlu0
        %v1946 = vpop.trf.xlu0
        %v1947 = vpop.trf.xlu0
        %v1948 = vpop.trf.xlu0
        %v1949 = vpop.trf.xlu0
        %v1950 = vpop.trf.xlu0
        %v1951 = vpop.trf.xlu0
        %v1952 = vpop.trf.xlu0
        %1953 = vxpose.xlu0.c.b16.start [1/8] %v1156, 128
        %1954 = vxpose.xlu0.c.b16.cont [2/8] 0, 128
        %1955 = vxpose.xlu0.c.b16.cont [3/8] 0, 128
        %1956 = vxpose.xlu0.c.b16.cont [4/8] 0, 128
        %1957 = vxpose.xlu0.c.b16.cont [5/8] 0, 128
        %1958 = vxpose.xlu0.c.b16.cont [6/8] 0, 128
        %1959 = vxpose.xlu0.c.b16.cont [7/8] 0, 128
        %1960 = vxpose.xlu0.c.b16.end [8/8] 0, 128
        %v1961 = vpop.trf.xlu0
        %v1962 = vpop.trf.xlu0
        %v1963 = vpop.trf.xlu0
        %v1964 = vpop.trf.xlu0
        %v1965 = vpop.trf.xlu0
        %v1966 = vpop.trf.xlu0
        %v1967 = vpop.trf.xlu0
        %v1968 = vpop.trf.xlu0
        %1969 = vxpose.xlu0.c.b16.start [1/8] %v1157, 128
        %1970 = vxpose.xlu0.c.b16.cont [2/8] 0, 128
        %1971 = vxpose.xlu0.c.b16.cont [3/8] 0, 128
        %1972 = vxpose.xlu0.c.b16.cont [4/8] 0, 128
        %1973 = vxpose.xlu0.c.b16.cont [5/8] 0, 128
        %1974 = vxpose.xlu0.c.b16.cont [6/8] 0, 128
        %1975 = vxpose.xlu0.c.b16.cont [7/8] 0, 128
        %1976 = vxpose.xlu0.c.b16.end [8/8] 0, 128
        %v1977 = vpop.trf.xlu0
        %v1978 = vpop.trf.xlu0
        %v1979 = vpop.trf.xlu0
        %v1980 = vpop.trf.xlu0
        %v1981 = vpop.trf.xlu0
        %v1982 = vpop.trf.xlu0
        %v1983 = vpop.trf.xlu0
        %v1984 = vpop.trf.xlu0
        %1985 = vxpose.xlu0.c.b16.start [1/8] %v1158, 128
        %1986 = vxpose.xlu0.c.b16.cont [2/8] 0, 128
        %1987 = vxpose.xlu0.c.b16.cont [3/8] 0, 128
        %1988 = vxpose.xlu0.c.b16.cont [4/8] 0, 128
        %1989 = vxpose.xlu0.c.b16.cont [5/8] 0, 128
        %1990 = vxpose.xlu0.c.b16.cont [6/8] 0, 128
        %1991 = vxpose.xlu0.c.b16.cont [7/8] 0, 128
        %1992 = vxpose.xlu0.c.b16.end [8/8] 0, 128
        %v1993 = vpop.trf.xlu0
        %v1994 = vpop.trf.xlu0
        %v1995 = vpop.trf.xlu0
        %v1996 = vpop.trf.xlu0
        %v1997 = vpop.trf.xlu0
        %v1998 = vpop.trf.xlu0
        %v1999 = vpop.trf.xlu0
        %v2000 = vpop.trf.xlu0
        %v2001 = vcombine.low %v1881, %v1945
        %v2003 = vunpack.c.l.s4 1983009808
        %v2004 = vunpack.c.0.s8 %v2003
        %v2005 = vlaneseq
        %v2006 = vshrl.u32 %v2005, 7
        %v2007 = vsub.s32 %v2004, %v2006
        %v2008 = vrot.slane %v2001, %v2007
        %v2009 = vcombine.low %v1913, %v1977
        %v2011 = vunpack.c.l.s4 1983009808
        %v2012 = vunpack.c.0.s8 %v2011
        %v2013 = vlaneseq
        %v2014 = vshrl.u32 %v2013, 7
        %v2015 = vsub.s32 %v2012, %v2014
        %v2016 = vrot.slane %v2009, %v2015
        %v2017 = vcombine.low %v2008, %v2016
        %v2018 = vcombine.high %v2008, %v2016
        %v2020 = vunpack.c.l.s4 1934713408
        %v2021 = vunpack.c.0.s8 %v2020
        %v2022 = vlaneseq
        %v2023 = vshrl.u32 %v2022, 7
        %v2024 = vsub.s32 %v2021, %v2023
        %v2025 = vrot.slane %v2017, %v2024
        %v2027 = vunpack.c.l.s4 1934713408
        %v2028 = vunpack.c.0.s8 %v2027
        %v2029 = vlaneseq
        %v2030 = vshrl.u32 %v2029, 7
        %v2031 = vsub.s32 %v2028, %v2030
        %v2032 = vrot.slane %v2018, %v2031
        %v2033 = vcombine.high %v2025, 0
        %v2034 = vcombine.high %v2032, 0
        %v2035 = vcombine.low %v1897, %v1961
        %v2037 = vunpack.c.l.s4 1983009808
        %v2038 = vunpack.c.0.s8 %v2037
        %v2039 = vlaneseq
        %v2040 = vshrl.u32 %v2039, 7
        %v2041 = vsub.s32 %v2038, %v2040
        %v2042 = vrot.slane %v2035, %v2041
        %v2043 = vcombine.low %v1929, %v1993
        %v2045 = vunpack.c.l.s4 1983009808
        %v2046 = vunpack.c.0.s8 %v2045
        %v2047 = vlaneseq
        %v2048 = vshrl.u32 %v2047, 7
        %v2049 = vsub.s32 %v2046, %v2048
        %v2050 = vrot.slane %v2043, %v2049
        %v2051 = vcombine.low %v2042, %v2050
        %v2052 = vcombine.high %v2042, %v2050
        %v2054 = vunpack.c.l.s4 1934713408
        %v2055 = vunpack.c.0.s8 %v2054
        %v2056 = vlaneseq
        %v2057 = vshrl.u32 %v2056, 7
        %v2058 = vsub.s32 %v2055, %v2057
        %v2059 = vrot.slane %v2051, %v2058
        %v2061 = vunpack.c.l.s4 1934713408
        %v2062 = vunpack.c.0.s8 %v2061
        %v2063 = vlaneseq
        %v2064 = vshrl.u32 %v2063, 7
        %v2065 = vsub.s32 %v2062, %v2064
        %v2066 = vrot.slane %v2052, %v2065
        %v2067 = vcombine.high %v2059, 0
        %v2068 = vcombine.high %v2066, 0
        %v2071 = vpack.i.b16 %v2059, %v2025
        %v2073 = vshrl.u32 %v2025, 16
        %v2074 = vshrl.u32 %v2059, 16
        %v2075 = vpack.i.b16 %v2074, %v2073
        %v2079 = vpack.i.b16 %v2067, %v2033
        %v2081 = vshrl.u32 %v2033, 16
        %v2082 = vshrl.u32 %v2067, 16
        %v2083 = vpack.i.b16 %v2082, %v2081
        %v2087 = vpack.i.b16 %v2066, %v2032
        %v2089 = vshrl.u32 %v2032, 16
        %v2090 = vshrl.u32 %v2066, 16
        %v2091 = vpack.i.b16 %v2090, %v2089
        %v2095 = vpack.i.b16 %v2068, %v2034
        %v2097 = vshrl.u32 %v2034, 16
        %v2098 = vshrl.u32 %v2068, 16
        %v2099 = vpack.i.b16 %v2098, %v2097
        %2101 = vxpose.xlu0.c.b16.start [1/8] %v2071, 128
        %2102 = vxpose.xlu0.c.b16.cont [2/8] 0, 128
        %2103 = vxpose.xlu0.c.b16.cont [3/8] 0, 128
        %2104 = vxpose.xlu0.c.b16.cont [4/8] 0, 128
        %2105 = vxpose.xlu0.c.b16.cont [5/8] 0, 128
        %2106 = vxpose.xlu0.c.b16.cont [6/8] 0, 128
        %2107 = vxpose.xlu0.c.b16.cont [7/8] 0, 128
        %2108 = vxpose.xlu0.c.b16.end [8/8] 0, 128
        %v2109 = vpop.trf.xlu0
        %v2110 = vpop.trf.xlu0
        %v2111 = vpop.trf.xlu0
        %v2112 = vpop.trf.xlu0
        %v2113 = vpop.trf.xlu0
        %v2114 = vpop.trf.xlu0
        %v2115 = vpop.trf.xlu0
        %v2116 = vpop.trf.xlu0
        %2117 = vxpose.xlu0.c.b16.start [1/8] %v2075, 128
        %2118 = vxpose.xlu0.c.b16.cont [2/8] 0, 128
        %2119 = vxpose.xlu0.c.b16.cont [3/8] 0, 128
        %2120 = vxpose.xlu0.c.b16.cont [4/8] 0, 128
        %2121 = vxpose.xlu0.c.b16.cont [5/8] 0, 128
        %2122 = vxpose.xlu0.c.b16.cont [6/8] 0, 128
        %2123 = vxpose.xlu0.c.b16.cont [7/8] 0, 128
        %2124 = vxpose.xlu0.c.b16.end [8/8] 0, 128
        %v2125 = vpop.trf.xlu0
        %v2126 = vpop.trf.xlu0
        %v2127 = vpop.trf.xlu0
        %v2128 = vpop.trf.xlu0
        %v2129 = vpop.trf.xlu0
        %v2130 = vpop.trf.xlu0
        %v2131 = vpop.trf.xlu0
        %v2132 = vpop.trf.xlu0
        %2133 = vxpose.xlu0.c.b16.start [1/8] %v2079, 128
        %2134 = vxpose.xlu0.c.b16.cont [2/8] 0, 128
        %2135 = vxpose.xlu0.c.b16.cont [3/8] 0, 128
        %2136 = vxpose.xlu0.c.b16.cont [4/8] 0, 128
        %2137 = vxpose.xlu0.c.b16.cont [5/8] 0, 128
        %2138 = vxpose.xlu0.c.b16.cont [6/8] 0, 128
        %2139 = vxpose.xlu0.c.b16.cont [7/8] 0, 128
        %2140 = vxpose.xlu0.c.b16.end [8/8] 0, 128
        %v2141 = vpop.trf.xlu0
        %v2142 = vpop.trf.xlu0
        %v2143 = vpop.trf.xlu0
        %v2144 = vpop.trf.xlu0
        %v2145 = vpop.trf.xlu0
        %v2146 = vpop.trf.xlu0
        %v2147 = vpop.trf.xlu0
        %v2148 = vpop.trf.xlu0
        %2149 = vxpose.xlu0.c.b16.start [1/8] %v2083, 128
        %2150 = vxpose.xlu0.c.b16.cont [2/8] 0, 128
        %2151 = vxpose.xlu0.c.b16.cont [3/8] 0, 128
        %2152 = vxpose.xlu0.c.b16.cont [4/8] 0, 128
        %2153 = vxpose.xlu0.c.b16.cont [5/8] 0, 128
        %2154 = vxpose.xlu0.c.b16.cont [6/8] 0, 128
        %2155 = vxpose.xlu0.c.b16.cont [7/8] 0, 128
        %2156 = vxpose.xlu0.c.b16.end [8/8] 0, 128
        %v2157 = vpop.trf.xlu0
        %v2158 = vpop.trf.xlu0
        %v2159 = vpop.trf.xlu0
        %v2160 = vpop.trf.xlu0
        %v2161 = vpop.trf.xlu0
        %v2162 = vpop.trf.xlu0
        %v2163 = vpop.trf.xlu0
        %v2164 = vpop.trf.xlu0
        %2165 = vxpose.xlu0.c.b16.start [1/8] %v2087, 128
        %2166 = vxpose.xlu0.c.b16.cont [2/8] 0, 128
        %2167 = vxpose.xlu0.c.b16.cont [3/8] 0, 128
        %2168 = vxpose.xlu0.c.b16.cont [4/8] 0, 128
        %2169 = vxpose.xlu0.c.b16.cont [5/8] 0, 128
        %2170 = vxpose.xlu0.c.b16.cont [6/8] 0, 128
        %2171 = vxpose.xlu0.c.b16.cont [7/8] 0, 128
        %2172 = vxpose.xlu0.c.b16.end [8/8] 0, 128
        %v2173 = vpop.trf.xlu0
        %v2174 = vpop.trf.xlu0
        %v2175 = vpop.trf.xlu0
        %v2176 = vpop.trf.xlu0
        %v2177 = vpop.trf.xlu0
        %v2178 = vpop.trf.xlu0
        %v2179 = vpop.trf.xlu0
        %v2180 = vpop.trf.xlu0
        %2181 = vxpose.xlu0.c.b16.start [1/8] %v2091, 128
        %2182 = vxpose.xlu0.c.b16.cont [2/8] 0, 128
        %2183 = vxpose.xlu0.c.b16.cont [3/8] 0, 128
        %2184 = vxpose.xlu0.c.b16.cont [4/8] 0, 128
        %2185 = vxpose.xlu0.c.b16.cont [5/8] 0, 128
        %2186 = vxpose.xlu0.c.b16.cont [6/8] 0, 128
        %2187 = vxpose.xlu0.c.b16.cont [7/8] 0, 128
        %2188 = vxpose.xlu0.c.b16.end [8/8] 0, 128
        %v2189 = vpop.trf.xlu0
        %v2190 = vpop.trf.xlu0
        %v2191 = vpop.trf.xlu0
        %v2192 = vpop.trf.xlu0
        %v2193 = vpop.trf.xlu0
        %v2194 = vpop.trf.xlu0
        %v2195 = vpop.trf.xlu0
        %v2196 = vpop.trf.xlu0
        %2197 = vxpose.xlu0.c.b16.start [1/8] %v2095, 128
        %2198 = vxpose.xlu0.c.b16.cont [2/8] 0, 128
        %2199 = vxpose.xlu0.c.b16.cont [3/8] 0, 128
        %2200 = vxpose.xlu0.c.b16.cont [4/8] 0, 128
        %2201 = vxpose.xlu0.c.b16.cont [5/8] 0, 128
        %2202 = vxpose.xlu0.c.b16.cont [6/8] 0, 128
        %2203 = vxpose.xlu0.c.b16.cont [7/8] 0, 128
        %2204 = vxpose.xlu0.c.b16.end [8/8] 0, 128
        %v2205 = vpop.trf.xlu0
        %v2206 = vpop.trf.xlu0
        %v2207 = vpop.trf.xlu0
        %v2208 = vpop.trf.xlu0
        %v2209 = vpop.trf.xlu0
        %v2210 = vpop.trf.xlu0
        %v2211 = vpop.trf.xlu0
        %v2212 = vpop.trf.xlu0
        %2213 = vxpose.xlu0.c.b16.start [1/8] %v2099, 128
        %2214 = vxpose.xlu0.c.b16.cont [2/8] 0, 128
        %2215 = vxpose.xlu0.c.b16.cont [3/8] 0, 128
        %2216 = vxpose.xlu0.c.b16.cont [4/8] 0, 128
        %2217 = vxpose.xlu0.c.b16.cont [5/8] 0, 128
        %2218 = vxpose.xlu0.c.b16.cont [6/8] 0, 128
        %2219 = vxpose.xlu0.c.b16.cont [7/8] 0, 128
        %2220 = vxpose.xlu0.c.b16.end [8/8] 0, 128
        %v2221 = vpop.trf.xlu0
        %v2222 = vpop.trf.xlu0
        %v2223 = vpop.trf.xlu0
        %v2224 = vpop.trf.xlu0
        %v2225 = vpop.trf.xlu0
        %v2226 = vpop.trf.xlu0
        %v2227 = vpop.trf.xlu0
        %v2228 = vpop.trf.xlu0
        %v2229 = vcombine.low %v2109, %v2173
        %v2231 = vunpack.c.l.s4 1983009808
        %v2232 = vunpack.c.0.s8 %v2231
        %v2233 = vlaneseq
        %v2234 = vshrl.u32 %v2233, 7
        %v2235 = vsub.s32 %v2232, %v2234
        %v2236 = vrot.slane %v2229, %v2235
        %v2237 = vcombine.low %v2141, %v2205
        %v2239 = vunpack.c.l.s4 1983009808
        %v2240 = vunpack.c.0.s8 %v2239
        %v2241 = vlaneseq
        %v2242 = vshrl.u32 %v2241, 7
        %v2243 = vsub.s32 %v2240, %v2242
        %v2244 = vrot.slane %v2237, %v2243
        %v2245 = vcombine.low %v2236, %v2244
        %v2247 = vunpack.c.l.s4 1934713408
        %v2248 = vunpack.c.0.s8 %v2247
        %v2249 = vlaneseq
        %v2250 = vshrl.u32 %v2249, 7
        %v2251 = vsub.s32 %v2248, %v2250
        %v2252 = vrot.slane %v2245, %v2251
        %v2253 = vcombine.high %v2252, 0
        %v2254 = vcombine.low %v2125, %v2189
        %v2256 = vunpack.c.l.s4 1983009808
        %v2257 = vunpack.c.0.s8 %v2256
        %v2258 = vlaneseq
        %v2259 = vshrl.u32 %v2258, 7
        %v2260 = vsub.s32 %v2257, %v2259
        %v2261 = vrot.slane %v2254, %v2260
        %v2262 = vcombine.low %v2157, %v2221
        %v2264 = vunpack.c.l.s4 1983009808
        %v2265 = vunpack.c.0.s8 %v2264
        %v2266 = vlaneseq
        %v2267 = vshrl.u32 %v2266, 7
        %v2268 = vsub.s32 %v2265, %v2267
        %v2269 = vrot.slane %v2262, %v2268
        %v2270 = vcombine.low %v2261, %v2269
        %v2272 = vunpack.c.l.s4 1934713408
        %v2273 = vunpack.c.0.s8 %v2272
        %v2274 = vlaneseq
        %v2275 = vshrl.u32 %v2274, 7
        %v2276 = vsub.s32 %v2273, %v2275
        %v2277 = vrot.slane %v2270, %v2276
        %v2278 = vcombine.high %v2277, 0
        %v2281 = vpack.i.b16 %v2277, %v2252
        %v2282 = vshrl.u32 %v2252, 16
        %v2283 = vshrl.u32 %v2277, 16
        %v2284 = vpack.i.b16 %v2283, %v2282
        %v2287 = vpack.i.b16 %v2278, %v2253
        %v2288 = vshrl.u32 %v2253, 16
        %v2289 = vshrl.u32 %v2278, 16
        %v2290 = vpack.i.b16 %v2289, %v2288
        %v2292 = vsel %vm1639, %v2281, 0
        %v2295 = vsel %vm1639, %v1869, 0
        %2297 = vmatprep.subr.bf16.mxu0 0
        %2298 = vmatpush1.bf16.xpose.msra.mxu0 0
        %2299 = vmatprep.subr.bf16.mxu0 0
        %2300 = vmatpush1.bf16.xpose.msra.mxu0 0
        %2301 = vmatprep.subr.bf16.mxu0 0
        %2302 = vmatpush1.bf16.xpose.msra.mxu0 0
        %2303 = vmatprep.subr.bf16.mxu0 0
        %2304 = vmatpush1.bf16.xpose.msra.mxu0 0
        %2305 = vmatprep.subr.bf16.mxu0 0
        %2306 = vmatpush1.bf16.xpose.msra.mxu0 0
        %2307 = vmatprep.subr.bf16.mxu0 0
        %2308 = vmatpush1.bf16.xpose.msra.mxu0 0
        %2309 = vmatprep.subr.bf16.mxu0 0
        %2310 = vmatpush1.bf16.xpose.msra.mxu0 0
        %2311 = vmatprep.subr.bf16.mxu0 0
        %2312 = vmatpush1.bf16.xpose.msra.mxu0 %v2295
        %2313 = vmatprep.subr.bf16.mxu0 0
        %2314 = vmatpush2.bf16.xpose.msra.mxu0 0
        %2315 = vmatprep.subr.bf16.mxu0 0
        %2316 = vmatpush2.bf16.xpose.msra.mxu0 0
        %2317 = vmatprep.subr.bf16.mxu0 0
        %2318 = vmatpush2.bf16.xpose.msra.mxu0 0
        %2319 = vmatprep.subr.bf16.mxu0 0
        %2320 = vmatpush2.bf16.xpose.msra.mxu0 0
        %2321 = vmatprep.subr.bf16.mxu0 0
        %2322 = vmatpush2.bf16.xpose.msra.mxu0 0
        %2323 = vmatprep.subr.bf16.mxu0 0
        %2324 = vmatpush2.bf16.xpose.msra.mxu0 0
        %2325 = vmatprep.subr.bf16.mxu0 0
        %2326 = vmatpush2.bf16.xpose.msra.mxu0 0
        %2327 = vmatprep.subr.bf16.mxu0 0
        %2328 = vmatpush2.bf16.xpose.msra.mxu0 0
        %2329 = vmatprep.mubr.bf16.mxu0 0
        %2330 = vmatmul.mubr.bf16.gmra.mxu0 %v2292
        %v2331 = vpop.f32.mrf.mxu0
        %v2332 = vadd.f32 0.0, %v2331
        %v2333 = vpop.f32.mrf.mxu0
        %v2334 = vpop.f32.mrf.mxu0
        %v2335 = vpop.f32.mrf.mxu0
        %2336 = vdwg.mxu0
        %v2338 = vsel %vm1639, %v2284, 0
        %v2341 = vsel %vm1639, %v1870, 0
        %2343 = vmatprep.subr.bf16.mxu0 0
        %2344 = vmatpush1.bf16.xpose.msra.mxu0 0
        %2345 = vmatprep.subr.bf16.mxu0 0
        %2346 = vmatpush1.bf16.xpose.msra.mxu0 0
        %2347 = vmatprep.subr.bf16.mxu0 0
        %2348 = vmatpush1.bf16.xpose.msra.mxu0 0
        %2349 = vmatprep.subr.bf16.mxu0 0
        %2350 = vmatpush1.bf16.xpose.msra.mxu0 0
        %2351 = vmatprep.subr.bf16.mxu0 0
        %2352 = vmatpush1.bf16.xpose.msra.mxu0 0
        %2353 = vmatprep.subr.bf16.mxu0 0
        %2354 = vmatpush1.bf16.xpose.msra.mxu0 0
        %2355 = vmatprep.subr.bf16.mxu0 0
        %2356 = vmatpush1.bf16.xpose.msra.mxu0 0
        %2357 = vmatprep.subr.bf16.mxu0 0
        %2358 = vmatpush1.bf16.xpose.msra.mxu0 %v2341
        %2359 = vmatprep.subr.bf16.mxu0 0
        %2360 = vmatpush2.bf16.xpose.msra.mxu0 0
        %2361 = vmatprep.subr.bf16.mxu0 0
        %2362 = vmatpush2.bf16.xpose.msra.mxu0 0
        %2363 = vmatprep.subr.bf16.mxu0 0
        %2364 = vmatpush2.bf16.xpose.msra.mxu0 0
        %2365 = vmatprep.subr.bf16.mxu0 0
        %2366 = vmatpush2.bf16.xpose.msra.mxu0 0
        %2367 = vmatprep.subr.bf16.mxu0 0
        %2368 = vmatpush2.bf16.xpose.msra.mxu0 0
        %2369 = vmatprep.subr.bf16.mxu0 0
        %2370 = vmatpush2.bf16.xpose.msra.mxu0 0
        %2371 = vmatprep.subr.bf16.mxu0 0
        %2372 = vmatpush2.bf16.xpose.msra.mxu0 0
        %2373 = vmatprep.subr.bf16.mxu0 0
        %2374 = vmatpush2.bf16.xpose.msra.mxu0 0
        %2375 = vmatprep.mubr.bf16.mxu0 0
        %2376 = vmatmul.mubr.bf16.gmra.mxu0 %v2338
        %v2377 = vpop.f32.mrf.mxu0
        %v2378 = vadd.f32 0.0, %v2377
        %v2379 = vpop.f32.mrf.mxu0
        %v2380 = vpop.f32.mrf.mxu0
        %v2381 = vpop.f32.mrf.mxu0
        %2382 = vdwg.mxu0
        %v2384 = vsel %vm1639, %v2287, 0
        %v2387 = vsel %vm1639, %v1871, 0
        %2389 = vmatprep.subr.bf16.mxu0 0
        %2390 = vmatpush1.bf16.xpose.msra.mxu0 0
        %2391 = vmatprep.subr.bf16.mxu0 0
        %2392 = vmatpush1.bf16.xpose.msra.mxu0 0
        %2393 = vmatprep.subr.bf16.mxu0 0
        %2394 = vmatpush1.bf16.xpose.msra.mxu0 0
        %2395 = vmatprep.subr.bf16.mxu0 0
        %2396 = vmatpush1.bf16.xpose.msra.mxu0 0
        %2397 = vmatprep.subr.bf16.mxu0 0
        %2398 = vmatpush1.bf16.xpose.msra.mxu0 0
        %2399 = vmatprep.subr.bf16.mxu0 0
        %2400 = vmatpush1.bf16.xpose.msra.mxu0 0
        %2401 = vmatprep.subr.bf16.mxu0 0
        %2402 = vmatpush1.bf16.xpose.msra.mxu0 0
        %2403 = vmatprep.subr.bf16.mxu0 0
        %2404 = vmatpush1.bf16.xpose.msra.mxu0 %v2387
        %2405 = vmatprep.subr.bf16.mxu0 0
        %2406 = vmatpush2.bf16.xpose.msra.mxu0 0
        %2407 = vmatprep.subr.bf16.mxu0 0
        %2408 = vmatpush2.bf16.xpose.msra.mxu0 0
        %2409 = vmatprep.subr.bf16.mxu0 0
        %2410 = vmatpush2.bf16.xpose.msra.mxu0 0
        %2411 = vmatprep.subr.bf16.mxu0 0
        %2412 = vmatpush2.bf16.xpose.msra.mxu0 0
        %2413 = vmatprep.subr.bf16.mxu0 0
        %2414 = vmatpush2.bf16.xpose.msra.mxu0 0
        %2415 = vmatprep.subr.bf16.mxu0 0
        %2416 = vmatpush2.bf16.xpose.msra.mxu0 0
        %2417 = vmatprep.subr.bf16.mxu0 0
        %2418 = vmatpush2.bf16.xpose.msra.mxu0 0
        %2419 = vmatprep.subr.bf16.mxu0 0
        %2420 = vmatpush2.bf16.xpose.msra.mxu0 0
        %2421 = vmatprep.mubr.bf16.mxu0 0
        %2422 = vmatmul.mubr.bf16.gmra.mxu0 %v2384
        %v2423 = vpop.f32.mrf.mxu0
        %v2424 = vadd.f32 0.0, %v2423
        %v2425 = vpop.f32.mrf.mxu0
        %v2426 = vpop.f32.mrf.mxu0
        %v2427 = vpop.f32.mrf.mxu0
        %2428 = vdwg.mxu0
        %v2430 = vsel %vm1639, %v2290, 0
        %v2433 = vsel %vm1639, %v1872, 0
        %2435 = vmatprep.subr.bf16.mxu0 0
        %2436 = vmatpush1.bf16.xpose.msra.mxu0 0
        %2437 = vmatprep.subr.bf16.mxu0 0
        %2438 = vmatpush1.bf16.xpose.msra.mxu0 0
        %2439 = vmatprep.subr.bf16.mxu0 0
        %2440 = vmatpush1.bf16.xpose.msra.mxu0 0
        %2441 = vmatprep.subr.bf16.mxu0 0
        %2442 = vmatpush1.bf16.xpose.msra.mxu0 0
        %2443 = vmatprep.subr.bf16.mxu0 0
        %2444 = vmatpush1.bf16.xpose.msra.mxu0 0
        %2445 = vmatprep.subr.bf16.mxu0 0
        %2446 = vmatpush1.bf16.xpose.msra.mxu0 0
        %2447 = vmatprep.subr.bf16.mxu0 0
        %2448 = vmatpush1.bf16.xpose.msra.mxu0 0
        %2449 = vmatprep.subr.bf16.mxu0 0
        %2450 = vmatpush1.bf16.xpose.msra.mxu0 %v2433
        %2451 = vmatprep.subr.bf16.mxu0 0
        %2452 = vmatpush2.bf16.xpose.msra.mxu0 0
        %2453 = vmatprep.subr.bf16.mxu0 0
        %2454 = vmatpush2.bf16.xpose.msra.mxu0 0
        %2455 = vmatprep.subr.bf16.mxu0 0
        %2456 = vmatpush2.bf16.xpose.msra.mxu0 0
        %2457 = vmatprep.subr.bf16.mxu0 0
        %2458 = vmatpush2.bf16.xpose.msra.mxu0 0
        %2459 = vmatprep.subr.bf16.mxu0 0
        %2460 = vmatpush2.bf16.xpose.msra.mxu0 0
        %2461 = vmatprep.subr.bf16.mxu0 0
        %2462 = vmatpush2.bf16.xpose.msra.mxu0 0
        %2463 = vmatprep.subr.bf16.mxu0 0
        %2464 = vmatpush2.bf16.xpose.msra.mxu0 0
        %2465 = vmatprep.subr.bf16.mxu0 0
        %2466 = vmatpush2.bf16.xpose.msra.mxu0 0
        %2467 = vmatprep.mubr.bf16.mxu0 0
        %2468 = vmatmul.mubr.bf16.gmra.mxu0 %v2430
        %v2469 = vpop.f32.mrf.mxu0
        %v2470 = vadd.f32 0.0, %v2469
        %v2471 = vpop.f32.mrf.mxu0
        %v2472 = vpop.f32.mrf.mxu0
        %v2473 = vpop.f32.mrf.mxu0
        %2474 = vdwg.mxu0
        %2475 = vxpose.xlu0.b32.start [1/16] %v2332, 128
        %2476 = vxpose.xlu0.b32.cont [2/16] 0.0, 128
        %2477 = vxpose.xlu0.b32.cont [3/16] 0.0, 128
        %2478 = vxpose.xlu0.b32.cont [4/16] 0.0, 128
        %2479 = vxpose.xlu0.b32.cont [5/16] 0.0, 128
        %2480 = vxpose.xlu0.b32.cont [6/16] 0.0, 128
        %2481 = vxpose.xlu0.b32.cont [7/16] 0.0, 128
        %2482 = vxpose.xlu0.b32.cont [8/16] 0.0, 128
        %2483 = vxpose.xlu0.b32.cont [9/16] 0.0, 128
        %2484 = vxpose.xlu0.b32.cont [10/16] 0.0, 128
        %2485 = vxpose.xlu0.b32.cont [11/16] 0.0, 128
        %2486 = vxpose.xlu0.b32.cont [12/16] 0.0, 128
        %2487 = vxpose.xlu0.b32.cont [13/16] 0.0, 128
        %2488 = vxpose.xlu0.b32.cont [14/16] 0.0, 128
        %2489 = vxpose.xlu0.b32.cont [15/16] 0.0, 128
        %2490 = vxpose.xlu0.b32.end [16/16] 0.0, 128
        %v2491 = vpop.trf.xlu0
        %v2492 = vpop.trf.xlu0
        %v2493 = vpop.trf.xlu0
        %v2494 = vpop.trf.xlu0
        %v2495 = vpop.trf.xlu0
        %v2496 = vpop.trf.xlu0
        %v2497 = vpop.trf.xlu0
        %v2498 = vpop.trf.xlu0
        %v2499 = vpop.trf.xlu0
        %v2500 = vpop.trf.xlu0
        %v2501 = vpop.trf.xlu0
        %v2502 = vpop.trf.xlu0
        %v2503 = vpop.trf.xlu0
        %v2504 = vpop.trf.xlu0
        %v2505 = vpop.trf.xlu0
        %v2506 = vpop.trf.xlu0
        %2507 = vxpose.xlu0.b32.start [1/16] %v2378, 128
        %2508 = vxpose.xlu0.b32.cont [2/16] 0.0, 128
        %2509 = vxpose.xlu0.b32.cont [3/16] 0.0, 128
        %2510 = vxpose.xlu0.b32.cont [4/16] 0.0, 128
        %2511 = vxpose.xlu0.b32.cont [5/16] 0.0, 128
        %2512 = vxpose.xlu0.b32.cont [6/16] 0.0, 128
        %2513 = vxpose.xlu0.b32.cont [7/16] 0.0, 128
        %2514 = vxpose.xlu0.b32.cont [8/16] 0.0, 128
        %2515 = vxpose.xlu0.b32.cont [9/16] 0.0, 128
        %2516 = vxpose.xlu0.b32.cont [10/16] 0.0, 128
        %2517 = vxpose.xlu0.b32.cont [11/16] 0.0, 128
        %2518 = vxpose.xlu0.b32.cont [12/16] 0.0, 128
        %2519 = vxpose.xlu0.b32.cont [13/16] 0.0, 128
        %2520 = vxpose.xlu0.b32.cont [14/16] 0.0, 128
        %2521 = vxpose.xlu0.b32.cont [15/16] 0.0, 128
        %2522 = vxpose.xlu0.b32.end [16/16] 0.0, 128
        %v2523 = vpop.trf.xlu0
        %v2524 = vpop.trf.xlu0
        %v2525 = vpop.trf.xlu0
        %v2526 = vpop.trf.xlu0
        %v2527 = vpop.trf.xlu0
        %v2528 = vpop.trf.xlu0
        %v2529 = vpop.trf.xlu0
        %v2530 = vpop.trf.xlu0
        %v2531 = vpop.trf.xlu0
        %v2532 = vpop.trf.xlu0
        %v2533 = vpop.trf.xlu0
        %v2534 = vpop.trf.xlu0
        %v2535 = vpop.trf.xlu0
        %v2536 = vpop.trf.xlu0
        %v2537 = vpop.trf.xlu0
        %v2538 = vpop.trf.xlu0
        %2539 = vxpose.xlu0.b32.start [1/16] %v2424, 128
        %2540 = vxpose.xlu0.b32.cont [2/16] 0.0, 128
        %2541 = vxpose.xlu0.b32.cont [3/16] 0.0, 128
        %2542 = vxpose.xlu0.b32.cont [4/16] 0.0, 128
        %2543 = vxpose.xlu0.b32.cont [5/16] 0.0, 128
        %2544 = vxpose.xlu0.b32.cont [6/16] 0.0, 128
        %2545 = vxpose.xlu0.b32.cont [7/16] 0.0, 128
        %2546 = vxpose.xlu0.b32.cont [8/16] 0.0, 128
        %2547 = vxpose.xlu0.b32.cont [9/16] 0.0, 128
        %2548 = vxpose.xlu0.b32.cont [10/16] 0.0, 128
        %2549 = vxpose.xlu0.b32.cont [11/16] 0.0, 128
        %2550 = vxpose.xlu0.b32.cont [12/16] 0.0, 128
        %2551 = vxpose.xlu0.b32.cont [13/16] 0.0, 128
        %2552 = vxpose.xlu0.b32.cont [14/16] 0.0, 128
        %2553 = vxpose.xlu0.b32.cont [15/16] 0.0, 128
        %2554 = vxpose.xlu0.b32.end [16/16] 0.0, 128
        %v2555 = vpop.trf.xlu0
        %v2556 = vpop.trf.xlu0
        %v2557 = vpop.trf.xlu0
        %v2558 = vpop.trf.xlu0
        %v2559 = vpop.trf.xlu0
        %v2560 = vpop.trf.xlu0
        %v2561 = vpop.trf.xlu0
        %v2562 = vpop.trf.xlu0
        %v2563 = vpop.trf.xlu0
        %v2564 = vpop.trf.xlu0
        %v2565 = vpop.trf.xlu0
        %v2566 = vpop.trf.xlu0
        %v2567 = vpop.trf.xlu0
        %v2568 = vpop.trf.xlu0
        %v2569 = vpop.trf.xlu0
        %v2570 = vpop.trf.xlu0
        %2571 = vxpose.xlu0.b32.start [1/16] %v2470, 128
        %2572 = vxpose.xlu0.b32.cont [2/16] 0.0, 128
        %2573 = vxpose.xlu0.b32.cont [3/16] 0.0, 128
        %2574 = vxpose.xlu0.b32.cont [4/16] 0.0, 128
        %2575 = vxpose.xlu0.b32.cont [5/16] 0.0, 128
        %2576 = vxpose.xlu0.b32.cont [6/16] 0.0, 128
        %2577 = vxpose.xlu0.b32.cont [7/16] 0.0, 128
        %2578 = vxpose.xlu0.b32.cont [8/16] 0.0, 128
        %2579 = vxpose.xlu0.b32.cont [9/16] 0.0, 128
        %2580 = vxpose.xlu0.b32.cont [10/16] 0.0, 128
        %2581 = vxpose.xlu0.b32.cont [11/16] 0.0, 128
        %2582 = vxpose.xlu0.b32.cont [12/16] 0.0, 128
        %2583 = vxpose.xlu0.b32.cont [13/16] 0.0, 128
        %2584 = vxpose.xlu0.b32.cont [14/16] 0.0, 128
        %2585 = vxpose.xlu0.b32.cont [15/16] 0.0, 128
        %2586 = vxpose.xlu0.b32.end [16/16] 0.0, 128
        %v2587 = vpop.trf.xlu0
        %v2588 = vpop.trf.xlu0
        %v2589 = vpop.trf.xlu0
        %v2590 = vpop.trf.xlu0
        %v2591 = vpop.trf.xlu0
        %v2592 = vpop.trf.xlu0
        %v2593 = vpop.trf.xlu0
        %v2594 = vpop.trf.xlu0
        %v2595 = vpop.trf.xlu0
        %v2596 = vpop.trf.xlu0
        %v2597 = vpop.trf.xlu0
        %v2598 = vpop.trf.xlu0
        %v2599 = vpop.trf.xlu0
        %v2600 = vpop.trf.xlu0
        %v2601 = vpop.trf.xlu0
        %v2602 = vpop.trf.xlu0
        %v2603 = vcombine.low %v2491, %v2555
        %v2604 = vcombine.high %v2491, %v2555
        %v2606 = vunpack.c.l.s4 1983009808
        %v2607 = vunpack.c.0.s8 %v2606
        %v2608 = vlaneseq
        %v2609 = vshrl.u32 %v2608, 7
        %v2610 = vsub.s32 %v2607, %v2609
        %v2611 = vrot.slane %v2603, %v2610
        %v2613 = vunpack.c.l.s4 1983009808
        %v2614 = vunpack.c.0.s8 %v2613
        %v2615 = vlaneseq
        %v2616 = vshrl.u32 %v2615, 7
        %v2617 = vsub.s32 %v2614, %v2616
        %v2618 = vrot.slane %v2604, %v2617
        %v2619 = vcombine.low %v2523, %v2587
        %v2620 = vcombine.high %v2523, %v2587
        %v2622 = vunpack.c.l.s4 1983009808
        %v2623 = vunpack.c.0.s8 %v2622
        %v2624 = vlaneseq
        %v2625 = vshrl.u32 %v2624, 7
        %v2626 = vsub.s32 %v2623, %v2625
        %v2627 = vrot.slane %v2619, %v2626
        %v2629 = vunpack.c.l.s4 1983009808
        %v2630 = vunpack.c.0.s8 %v2629
        %v2631 = vlaneseq
        %v2632 = vshrl.u32 %v2631, 7
        %v2633 = vsub.s32 %v2630, %v2632
        %v2634 = vrot.slane %v2620, %v2633
        %v2635 = vcombine.low %v2611, %v2627
        %v2636 = vcombine.high %v2611, %v2627
        %v2638 = vunpack.c.l.s4 1934713408
        %v2639 = vunpack.c.0.s8 %v2638
        %v2640 = vlaneseq
        %v2641 = vshrl.u32 %v2640, 7
        %v2642 = vsub.s32 %v2639, %v2641
        %v2643 = vrot.slane %v2635, %v2642
        %v2645 = vunpack.c.l.s4 1934713408
        %v2646 = vunpack.c.0.s8 %v2645
        %v2647 = vlaneseq
        %v2648 = vshrl.u32 %v2647, 7
        %v2649 = vsub.s32 %v2646, %v2648
        %v2650 = vrot.slane %v2636, %v2649
        %v2651 = vcombine.low %v2618, %v2634
        %v2652 = vcombine.high %v2618, %v2634
        %v2654 = vunpack.c.l.s4 1934713408
        %v2655 = vunpack.c.0.s8 %v2654
        %v2656 = vlaneseq
        %v2657 = vshrl.u32 %v2656, 7
        %v2658 = vsub.s32 %v2655, %v2657
        %v2659 = vrot.slane %v2651, %v2658
        %v2661 = vunpack.c.l.s4 1934713408
        %v2662 = vunpack.c.0.s8 %v2661
        %v2663 = vlaneseq
        %v2664 = vshrl.u32 %v2663, 7
        %v2665 = vsub.s32 %v2662, %v2664
        %v2666 = vrot.slane %v2652, %v2665
        %v2667 = vcombine.high %v2643, 0.0
        %v2668 = vcombine.high %v2650, 0.0
        %v2669 = vcombine.high %v2659, 0.0
        %v2670 = vcombine.high %v2666, 0.0
        %v2671 = vcombine.low %v2643, %v2650
        %v2673 = vunpack.c.l.s4 1983009808
        %v2674 = vunpack.c.0.s8 %v2673
        %v2675 = vlaneseq
        %v2676 = vshrl.u32 %v2675, 7
        %v2677 = vsub.s32 %v2674, %v2676
        %v2678 = vrot.slane %v2671, %v2677
        %v2679 = vcombine.low %v2667, %v2668
        %v2681 = vunpack.c.l.s4 1983009808
        %v2682 = vunpack.c.0.s8 %v2681
        %v2683 = vlaneseq
        %v2684 = vshrl.u32 %v2683, 7
        %v2685 = vsub.s32 %v2682, %v2684
        %v2686 = vrot.slane %v2679, %v2685
        %v2687 = vcombine.low %v2659, %v2666
        %v2689 = vunpack.c.l.s4 1983009808
        %v2690 = vunpack.c.0.s8 %v2689
        %v2691 = vlaneseq
        %v2692 = vshrl.u32 %v2691, 7
        %v2693 = vsub.s32 %v2690, %v2692
        %v2694 = vrot.slane %v2687, %v2693
        %v2695 = vcombine.low %v2669, %v2670
        %v2697 = vunpack.c.l.s4 1983009808
        %v2698 = vunpack.c.0.s8 %v2697
        %v2699 = vlaneseq
        %v2700 = vshrl.u32 %v2699, 7
        %v2701 = vsub.s32 %v2698, %v2700
        %v2702 = vrot.slane %v2695, %v2701
        %v2703 = vcombine.low %v2678, %v2686
        %v2704 = vcombine.high %v2678, %v2686
        %v2706 = vunpack.c.l.s4 1934713408
        %v2707 = vunpack.c.0.s8 %v2706
        %v2708 = vlaneseq
        %v2709 = vshrl.u32 %v2708, 7
        %v2710 = vsub.s32 %v2707, %v2709
        %v2711 = vrot.slane %v2703, %v2710
        %v2713 = vunpack.c.l.s4 1934713408
        %v2714 = vunpack.c.0.s8 %v2713
        %v2715 = vlaneseq
        %v2716 = vshrl.u32 %v2715, 7
        %v2717 = vsub.s32 %v2714, %v2716
        %v2718 = vrot.slane %v2704, %v2717
        %v2719 = vcombine.low %v2694, %v2702
        %v2720 = vcombine.high %v2694, %v2702
        %v2722 = vunpack.c.l.s4 1934713408
        %v2723 = vunpack.c.0.s8 %v2722
        %v2724 = vlaneseq
        %v2725 = vshrl.u32 %v2724, 7
        %v2726 = vsub.s32 %v2723, %v2725
        %v2727 = vrot.slane %v2719, %v2726
        %v2729 = vunpack.c.l.s4 1934713408
        %v2730 = vunpack.c.0.s8 %v2729
        %v2731 = vlaneseq
        %v2732 = vshrl.u32 %v2731, 7
        %v2733 = vsub.s32 %v2730, %v2732
        %v2734 = vrot.slane %v2720, %v2733
        %v2735 = vcombine.low %v2711, %v2727
        %v2736 = vcombine.high %v2711, %v2727
        %v2737 = vcombine.low %v2718, %v2734
        %v2738 = vcombine.high %v2718, %v2734
        %2740 = vrot.lane.b32.xlu0 %v2736, 8
        %v2741 = vpop.permute.xlu0 %2740
        %2744 = vrot.lane.b32.xlu0 %v2737, 16
        %v2745 = vpop.permute.xlu0 %2744
        %2748 = vrot.lane.b32.xlu0 %v2738, 24
        %v2749 = vpop.permute.xlu0 %2748
        %v2751 = vsel %vm1639, %v2735, %v2741
        %vm2752 = vcmask 130048
        %v2753 = vsel %vm2752, %v2751, %v2745
        %vm2754 = vcmask 195584
        %v2755 = vsel %vm2754, %v2753, %v2749
        %v2756 = vld [vmem:[#allocation2] sm:$0xff]
        %v2757 = vpack.c.bf16 %v2755, %v2755
        %v2758 = vld [vmem:[%s675] sm:$0xf]
        %v2759 = vld [vmem:[%s675 + $0x4] sm:$0xf]
        %v2760 = vld [vmem:[%s675 + $0x8] sm:$0xf]
        %v2761 = vld [vmem:[%s675 + $0xc] sm:$0xf]
        %v2766 = vunpack.c.l.b16 %v2758
        %v2767 = vunpack.c.l.b16 %v2759
        %v2768 = vunpack.c.l.b16 %v2760
        %v2769 = vunpack.c.l.b16 %v2761
        %v2770 = vpack.c.b16 %v2767, %v2766
        %v2771 = vpack.c.b16 %v2769, %v2768
        %v2775 = vsel %vm709, %v2757, 0
        %2777 = vmatprep.subr.bf16.mxu0 0
        %2778 = vmatpush1.bf16.msra.mxu0 0
        %2779 = vmatprep.subr.bf16.mxu0 0
        %2780 = vmatpush1.bf16.msra.mxu0 0
        %2781 = vmatprep.subr.bf16.mxu0 0
        %2782 = vmatpush1.bf16.msra.mxu0 0
        %2783 = vmatprep.subr.bf16.mxu0 0
        %2784 = vmatpush1.bf16.msra.mxu0 0
        %2785 = vmatprep.subr.bf16.mxu0 0
        %2786 = vmatpush1.bf16.msra.mxu0 0
        %2787 = vmatprep.subr.bf16.mxu0 0
        %2788 = vmatpush1.bf16.msra.mxu0 0
        %2789 = vmatprep.subr.bf16.mxu0 0
        %2790 = vmatpush1.bf16.msra.mxu0 %v2771
        %2791 = vmatprep.subr.bf16.mxu0 0
        %2792 = vmatpush1.bf16.msra.mxu0 %v2770
        %2793 = vmatprep.subr.bf16.mxu0 0
        %2794 = vmatpush2.bf16.msra.mxu0 0
        %2795 = vmatprep.subr.bf16.mxu0 0
        %2796 = vmatpush2.bf16.msra.mxu0 0
        %2797 = vmatprep.subr.bf16.mxu0 0
        %2798 = vmatpush2.bf16.msra.mxu0 0
        %2799 = vmatprep.subr.bf16.mxu0 0
        %2800 = vmatpush2.bf16.msra.mxu0 0
        %2801 = vmatprep.subr.bf16.mxu0 0
        %2802 = vmatpush2.bf16.msra.mxu0 0
        %2803 = vmatprep.subr.bf16.mxu0 0
        %2804 = vmatpush2.bf16.msra.mxu0 0
        %2805 = vmatprep.subr.bf16.mxu0 0
        %2806 = vmatpush2.bf16.msra.mxu0 0
        %2807 = vmatprep.subr.bf16.mxu0 0
        %2808 = vmatpush2.bf16.msra.mxu0 0
        %2809 = vmatprep.mubr.bf16.mxu0 0
        %2810 = vmatmul.mubr.bf16.gmra.mxu0 %v2775
        %v2811 = vpop.f32.mrf.mxu0
        %v2812 = vadd.f32 0.0, %v2811
        %v2813 = vpop.f32.mrf.mxu0
        %v2814 = vpop.f32.mrf.mxu0
        %v2815 = vpop.f32.mrf.mxu0
        %2816 = vdwg.mxu0
        %v2817 = vadd.f32 %v2756, %v2812
        %2818 = vst.msk [vmem:[#allocation2] sm:$0xff] %vm709, %v2817
        // Predicated region
        $region113: #{tpu_custom_call.1} parent=71 // pred_check
          %p2819 = pneg %p677
        $region114: #{tpu_custom_call.1} parent=71 // pred_check_branch
          %2821 = sbr.rel (%p2819) target = $region116
        $region115: #{tpu_custom_call.1} parent=71 // pred_region
          %v2822 = vld [vmem:[#allocation2] sm:$0xff]
          %v2823 = vadd.f32 %v683, %v2822
          %v2824 = vld [vmem:[%s10] sm:$0x1]
          %v2826 = vlaneseq
          %v2827 = vshrl.u32 %v2826, 7
          %v2828 = vsub.s32 0, %v2827
          %v2829 = vrot.slane %v2824, %v2828
          %v2831 = vadd.f32 %v2823, %v2829
          %v2832 = vsel %vm709, %v2831, 0.0
          %2833 = vadd.xlane.f32.xlu0 %v2832
          %v2834 = vpop.xlane.xlu0 %2833
          %v2835 = vrcp.pop 32.0
          %v2836 = vmul.f32 %v2834, %v2835
          %v2837 = vsub.f32 %v2831, %v2836
          %v2838 = vmul.f32 %v2837, %v2837
          %v2839 = vsel %vm709, %v2838, 0.0
          %2840 = vadd.xlane.f32.xlu0 %v2839
          %v2841 = vpop.xlane.xlu0 %2840
          %v2842 = vmul.f32 %v2841, %v2835
          %v2843 = vadd.f32 %v2842, 1e-05
          %v2844 = vrsqrt.pop %v2843
          %v2845 = vmul.f32 %v2837, %v2844
          %v2846 = vld [vmem:[%s11] sm:$0x1]
          %v2848 = vlaneseq
          %v2849 = vshrl.u32 %v2848, 7
          %v2850 = vsub.s32 0, %v2849
          %v2851 = vrot.slane %v2846, %v2850
          %v2853 = vmul.f32 %v2845, %v2851
          %v2854 = vld [vmem:[%s12] sm:$0x1]
          %v2856 = vlaneseq
          %v2857 = vshrl.u32 %v2856, 7
          %v2858 = vsub.s32 0, %v2857
          %v2859 = vrot.slane %v2854, %v2858
          %v2861 = vadd.f32 %v2853, %v2859
          %2862 = vst.msk [vmem:[%s670] sm:$0xff] %vm709, %v2861
        $region116: #{tpu_custom_call.1} parent=71 // pred_fallthru
          _
        %s2863 = sand.u32 %s375, 1
        %s2864 = scalar_lea.sflag [#allocation5], %s2863
        %s2865 = sand.u32 %s375, 1
        %s2866 = smul.addr %s2865, 8
        %s2867 = scalar_lea.vmem [#allocation18], %s2866
        // Predicated region
        $region117: #{tpu_custom_call.1} parent=71 // pred_check
          %p2868 = pneg %p385
        $region118: #{tpu_custom_call.1} parent=71 // pred_check_branch
          %2870 = sbr.rel (%p2868) target = $region120
        $region119: #{tpu_custom_call.1} parent=71 // pred_region
          %s2872 = ssub.s32 128, 128
          %2873 = vsyncadd %s2864, %s2872
          %s2874 = sadd.s32 %s42, %s41
          %s2875 = smul.addr %s2874, 128
          %s2876 = scalar_lea.hbm %s13, %s2875
          %s2878 = sshll.u32 %s2867, 4
          %s2879 = int_to_ptr.vmem [resolvable:$true] %s2878
          %2881 = dma.vmem_to_hbm [thread:$0]  %s2879, 128, %s2876, %s2864
        $region120: #{tpu_custom_call.1} parent=71 // pred_fallthru
          _
      $region72: #{tpu_custom_call.1} parent=5 // pred_fallthru
        _
      %p2882 = scmp.le.s32.totalorder 2, %s31
      // Predicated region
      $region121: #{tpu_custom_call.1} parent=5 // pred_check
        %p2883 = pneg %p2882
      $region122: #{tpu_custom_call.1} parent=5 // pred_check_branch
        %2885 = sbr.rel (%p2883) target = $region124
      $region123: #{tpu_custom_call.1} parent=5 // pred_region
        %s2886 = ssub.s32 %s31, 2
        // Predicated region
        $region125: #{tpu_custom_call.1} parent=123 // pred_check
          %p2887 = pneg %p391
        $region126: #{tpu_custom_call.1} parent=123 // pred_check_branch
          %2889 = sbr.rel (%p2887) target = $region128
        $region127: #{tpu_custom_call.1} parent=123 // pred_region
          %s2890 = sand.u32 %s376, 1
          %s2891 = scalar_lea.sflag [#allocation5], %s2890
          %s2892 = sand.u32 %s376, 1
          %s2893 = smul.addr %s2892, 8
          %s2894 = scalar_lea.vmem [#allocation18], %s2893
          %2895 = dma.done %s2891, 128
        $region128: #{tpu_custom_call.1} parent=123 // pred_fallthru
          _
      $region124: #{tpu_custom_call.1} parent=5 // pred_fallthru
        _
    $region6: #{tpu_custom_call.1} parent=1 // loop_footer
      %s35 = sadd.s32 1, %s31
    $region7: #{tpu_custom_call.1} parent=1 // loop_footer_branch
      %30 = sbr.rel target = $region3
    $region8: #{tpu_custom_call.1} parent=1 // loop_exit
      _
    %2896 = vsyncpa [#allocation4], 1
    %s2897 = scalar_lea.sflag [#allocation4], 1
    %2898 = vsyncpa %s2897, 1
    %2899 = vsyncpa [#allocation7], 1
    %s2900 = scalar_lea.sflag [#allocation7], 1
    %2901 = vsyncpa %s2900, 1
    %2902 = vsyncpa [#allocation10], 1
    %2903 = vsyncpa [#allocation13], 1
    %2904 = vsyncpa [#allocation16], 1
    %2905 = vsyncpa [#allocation5], 1
    %s2906 = scalar_lea.sflag [#allocation5], 1
    %2907 = vsyncpa %s2906, 1

</llo_original>
